<compile_context>
chip_gen: v7x
topology: tpu7x:2x2x1
jax: 0.10.0
libtpu: 0.0.40
codegen_flags: <defaults>
</compile_context>

<pallas_src>
import math

import jax
import jax.numpy as jnp
from jax.experimental import pallas as pl
from jax.experimental.pallas import tpu as pltpu


def _round_up(x: int, m: int) -> int:
    return (x + m - 1) // m * m


def _fused_time_embed_kernel(t_ref, freqs_ref, w1s_ref, w1c_ref, b1_ref,
                             w2_ref, b2_ref, out_ref):
    # t_ref:     (TB, 1)    f32 timesteps for this batch tile
    # freqs_ref: (1, half)  f32 hoisted frequency table
    # w1s_ref:   (half, E)  rows of W1 multiplied by sin()
    # w1c_ref:   (half, E)  rows of W1 multiplied by cos()
    # b1_ref:    (1, E), w2_ref: (E, E), b2_ref: (1, E)
    # out_ref:   (TB, E)
    arg = t_ref[...] * freqs_ref[...]                      # (TB, half)
    s = jnp.sin(arg)
    c = jnp.cos(arg)
    # First Linear on the [sin | cos] embedding WITHOUT materializing a concat.
    h = (jnp.dot(s, w1s_ref[...], preferred_element_type=jnp.float32)
         + jnp.dot(c, w1c_ref[...], preferred_element_type=jnp.float32)
         + b1_ref[...])
    h = h * (1.0 / (1.0 + jnp.exp(-h)))                    # SiLU
    out = jnp.dot(h, w2_ref[...], preferred_element_type=jnp.float32) + b2_ref[...]
    out_ref[...] = out.astype(out_ref.dtype)


def time_embed(t: jax.Array, w1: jax.Array, b1: jax.Array,
               w2: jax.Array, b2: jax.Array, *, block_b: int = 512) -> jax.Array:
    """Pallas equivalent of DiffusionModel.time_embed(t).

    t: (B,) integer/float timesteps.
    w1: (dim, E), b1: (E,), w2: (E, E), b2: (E,)   (x @ W + b convention)
    returns: (B, E) float32
    """
    B = t.shape[0]
    dim, E = w1.shape
    assert dim % 2 == 0 and dim >= 4, "even embedding dim (>= 4) expected"
    half = dim // 2

    # Hoisted frequency table (computed at trace time, passed as a VMEM input).
    scale = math.log(10000.0) / (half - 1)
    freqs = jnp.exp(jnp.arange(half, dtype=jnp.float32) * -scale).reshape(1, half)

    # Tile the batch axis: TB multiple of 8 sublanes, capped for VMEM headroom
    # (tiles here are tiny: weights ~320 KiB, activations (TB, 256) f32).
    TB = min(block_b, _round_up(B, 8))
    B_pad = _round_up(B, TB)
    t2d = t.astype(jnp.float32).reshape(B, 1)
    if B_pad != B:
        t2d = jnp.pad(t2d, ((0, B_pad - B), (0, 0)))

    w1s = w1[:half]            # (half, E): rows hit by sin()
    w1c = w1[half:]            # (half, E): rows hit by cos()
    b1r = b1.reshape(1, E)
    b2r = b2.reshape(1, E)

    grid = (pl.cdiv(B_pad, TB),)
    out = pl.pallas_call(
        _fused_time_embed_kernel,
        out_shape=jax.ShapeDtypeStruct((B_pad, E), jnp.float32),
        grid=grid,
        in_specs=[
            pl.BlockSpec((TB, 1), lambda i: (i, 0)),       # t   (tiled over B)
            pl.BlockSpec((1, half), lambda i: (0, 0)),     # freqs (resident)
            pl.BlockSpec((half, E), lambda i: (0, 0)),     # W1 sin half
            pl.BlockSpec((half, E), lambda i: (0, 0)),     # W1 cos half
            pl.BlockSpec((1, E), lambda i: (0, 0)),        # b1
            pl.BlockSpec((E, E), lambda i: (0, 0)),        # W2
            pl.BlockSpec((1, E), lambda i: (0, 0)),        # b2
        ],
        out_specs=pl.BlockSpec((TB, E), lambda i: (i, 0)),
        compiler_params=pltpu.CompilerParams(
            dimension_semantics=("parallel",)),
    )(t2d, freqs, w1s, w1c, b1r, w2, b2r)
    return out[:B]


def _reference_time_embed(t, dim, w1, b1, w2, b2):
    """Pure-jnp mirror of SinusoidalPosEmb(dim) -> Linear -> SiLU -> Linear."""
    half = dim // 2
    scale = math.log(10000.0) / (half - 1)
    freqs = jnp.exp(jnp.arange(half, dtype=jnp.float32) * -scale)
    emb = t.astype(jnp.float32)[:, None] * freqs[None, :]
    emb = jnp.concatenate([jnp.sin(emb), jnp.cos(emb)], axis=-1)
    h = emb @ w1 + b1
    h = h * (1.0 / (1.0 + jnp.exp(-h)))
    return h @ w2 + b2


if __name__ == "__main__":
    # Keep reference and kernel matmuls at full f32 accuracy for comparison.
    jax.config.update("jax_default_matmul_precision", "highest")

    key = jax.random.PRNGKey(0)
    base_channels = 64                  # = SinusoidalPosEmb dim in the module
    emb_dim = base_channels * 4         # = 256, multiple of 128 (lane-dense)
    B = 8

    k_t, k_w1, k_b1, k_w2, k_b2 = jax.random.split(key, 5)
    t = jax.random.randint(k_t, (B,), 0, 1000).astype(jnp.int32)
    w1 = jax.random.normal(k_w1, (base_channels, emb_dim), jnp.float32) * 0.05
    b1 = jax.random.normal(k_b1, (emb_dim,), jnp.float32) * 0.05
    w2 = jax.random.normal(k_w2, (emb_dim, emb_dim), jnp.float32) * 0.05
    b2 = jax.random.normal(k_b2, (emb_dim,), jnp.float32) * 0.05

    out = time_embed(t, w1, b1, w2, b2)
    jax.block_until_ready(out)

    ref = _reference_time_embed(t, base_channels, w1, b1, w2, b2)
    assert out.shape == (B, emb_dim) and out.dtype == jnp.float32
    # Tolerance covers cross-implementation sin/cos of large (t ~ 1e3 rad) args.
    assert bool(jnp.allclose(out, ref, atol=5e-3, rtol=5e-3)), (
        f"max abs err = {float(jnp.max(jnp.abs(out - ref)))}")
    print("KERNEL_OK")
</pallas_src>

<mosaic_0001>
module attributes {stable_mosaic.version = 11 : i64} {
  func.func @_fused_time_embed_kernel(%arg0: i32, %arg1: memref<8x1xf32, #tpu.memory_space<vmem>>, %arg2: memref<1x32xf32, #tpu.memory_space<vmem>>, %arg3: memref<32x256xf32, #tpu.memory_space<vmem>>, %arg4: memref<32x256xf32, #tpu.memory_space<vmem>>, %arg5: memref<1x256xf32, #tpu.memory_space<vmem>>, %arg6: memref<256x256xf32, #tpu.memory_space<vmem>>, %arg7: memref<1x256xf32, #tpu.memory_space<vmem>>, %arg8: memref<8x256xf32, #tpu.memory_space<vmem>>) attributes {dimension_semantics = [#tpu.dimension_semantics<parallel>], iteration_bounds = array<i64: 1>, scalar_prefetch = 0 : i64, scratch_operands = 0 : i64, tpu.core_type = #tpu.core_type<tc>, window_params = [{transform_indices = @transform_0, window_bounds = array<i64: 8, 1>}, {pipeline_mode = #tpu.pipeline_mode<synchronous>, transform_indices = @transform_1, window_bounds = array<i64: 1, 32>}, {pipeline_mode = #tpu.pipeline_mode<synchronous>, transform_indices = @transform_2, window_bounds = array<i64: 32, 256>}, {pipeline_mode = #tpu.pipeline_mode<synchronous>, transform_indices = @transform_3, window_bounds = array<i64: 32, 256>}, {pipeline_mode = #tpu.pipeline_mode<synchronous>, transform_indices = @transform_4, window_bounds = array<i64: 1, 256>}, {pipeline_mode = #tpu.pipeline_mode<synchronous>, transform_indices = @transform_5, window_bounds = array<i64: 256, 256>}, {pipeline_mode = #tpu.pipeline_mode<synchronous>, transform_indices = @transform_6, window_bounds = array<i64: 1, 256>}, {transform_indices = @transform_7, window_bounds = array<i64: 8, 256>}]} {
    %c0 = arith.constant 0 : index
    %c0_0 = arith.constant 0 : index
    %0 = vector.load %arg1[%c0, %c0_0] : memref<8x1xf32, #tpu.memory_space<vmem>>, vector<8x1xf32>
    %c0_1 = arith.constant 0 : index
    %c0_2 = arith.constant 0 : index
    %1 = vector.load %arg2[%c0_1, %c0_2] : memref<1x32xf32, #tpu.memory_space<vmem>>, vector<1x32xf32>
    %2 = vector.broadcast %0 : vector<8x1xf32> to vector<8x32xf32>
    %3 = vector.broadcast %1 : vector<1x32xf32> to vector<8x32xf32>
    %4 = arith.mulf %2, %3 : vector<8x32xf32>
    %5 = math.sin %4 : vector<8x32xf32>
    %6 = math.cos %4 : vector<8x32xf32>
    %c0_3 = arith.constant 0 : index
    %c0_4 = arith.constant 0 : index
    %7 = vector.load %arg3[%c0_3, %c0_4] : memref<32x256xf32, #tpu.memory_space<vmem>>, vector<32x256xf32>
    %cst = arith.constant dense<0.000000e+00> : vector<8x256xf32>
    %8 = tpu.matmul %5, %7, %cst {dimension_numbers = #tpu.dot_dimension_numbers<[1], [0], [0], [1], [0, 0, 1, 1], [], []>, precision = #tpu.contract_precision<fp32>} : vector<8x32xf32>, vector<32x256xf32>, vector<8x256xf32> -> vector<8x256xf32>
    %c0_5 = arith.constant 0 : index
    %c0_6 = arith.constant 0 : index
    %9 = vector.load %arg4[%c0_5, %c0_6] : memref<32x256xf32, #tpu.memory_space<vmem>>, vector<32x256xf32>
    %cst_7 = arith.constant dense<0.000000e+00> : vector<8x256xf32>
    %10 = tpu.matmul %6, %9, %cst_7 {dimension_numbers = #tpu.dot_dimension_numbers<[1], [0], [0], [1], [0, 0, 1, 1], [], []>, precision = #tpu.contract_precision<fp32>} : vector<8x32xf32>, vector<32x256xf32>, vector<8x256xf32> -> vector<8x256xf32>
    %11 = arith.addf %8, %10 : vector<8x256xf32>
    %c0_8 = arith.constant 0 : index
    %c0_9 = arith.constant 0 : index
    %12 = vector.load %arg5[%c0_8, %c0_9] : memref<1x256xf32, #tpu.memory_space<vmem>>, vector<1x256xf32>
    %13 = vector.broadcast %12 : vector<1x256xf32> to vector<8x256xf32>
    %14 = arith.addf %11, %13 : vector<8x256xf32>
    %cst_10 = arith.constant 0.000000e+00 : f32
    %15 = vector.broadcast %cst_10 : f32 to vector<8x256xf32>
    %16 = arith.subf %15, %14 : vector<8x256xf32>
    %17 = math.exp %16 : vector<8x256xf32>
    %cst_11 = arith.constant 1.000000e+00 : f32
    %18 = vector.broadcast %cst_11 : f32 to vector<8x256xf32>
    %19 = arith.addf %18, %17 : vector<8x256xf32>
    %cst_12 = arith.constant 1.000000e+00 : f32
    %20 = vector.broadcast %cst_12 : f32 to vector<8x256xf32>
    %21 = arith.divf %20, %19 : vector<8x256xf32>
    %22 = arith.mulf %14, %21 : vector<8x256xf32>
    %c0_13 = arith.constant 0 : index
    %c0_14 = arith.constant 0 : index
    %23 = vector.load %arg6[%c0_13, %c0_14] : memref<256x256xf32, #tpu.memory_space<vmem>>, vector<256x256xf32>
    %cst_15 = arith.constant dense<0.000000e+00> : vector<8x256xf32>
    %24 = tpu.matmul %22, %23, %cst_15 {dimension_numbers = #tpu.dot_dimension_numbers<[1], [0], [0], [1], [0, 0, 1, 1], [], []>, precision = #tpu.contract_precision<fp32>} : vector<8x256xf32>, vector<256x256xf32>, vector<8x256xf32> -> vector<8x256xf32>
    %c0_16 = arith.constant 0 : index
    %c0_17 = arith.constant 0 : index
    %25 = vector.load %arg7[%c0_16, %c0_17] : memref<1x256xf32, #tpu.memory_space<vmem>>, vector<1x256xf32>
    %26 = vector.broadcast %25 : vector<1x256xf32> to vector<8x256xf32>
    %27 = arith.addf %24, %26 : vector<8x256xf32>
    %c0_18 = arith.constant 0 : index
    %c0_19 = arith.constant 0 : index
    %28 = vector.load %arg8[%c0_18, %c0_19] : memref<8x256xf32, #tpu.memory_space<vmem>>, vector<8x256xf32>
    tpu.vector_store %arg8[%c0_18, %c0_19], %27 {strides = array<i32>} : memref<8x256xf32, #tpu.memory_space<vmem>>, vector<8x256xf32>,
    return
  }
  func.func @transform_0(%arg0: i32) -> (i32, i32) {
    %c0_i32 = arith.constant 0 : i32
    %c0_i32_0 = arith.constant 0 : i32
    return %arg0, %c0_i32 : i32, i32
  }
  func.func @transform_1(%arg0: i32) -> (i32, i32) {
    %c0_i32 = arith.constant 0 : i32
    %c0_i32_0 = arith.constant 0 : i32
    %c0_i32_1 = arith.constant 0 : i32
    return %c0_i32, %c0_i32_0 : i32, i32
  }
  func.func @transform_2(%arg0: i32) -> (i32, i32) {
    %c0_i32 = arith.constant 0 : i32
    %c0_i32_0 = arith.constant 0 : i32
    %c0_i32_1 = arith.constant 0 : i32
    return %c0_i32, %c0_i32_0 : i32, i32
  }
  func.func @transform_3(%arg0: i32) -> (i32, i32) {
    %c0_i32 = arith.constant 0 : i32
    %c0_i32_0 = arith.constant 0 : i32
    %c0_i32_1 = arith.constant 0 : i32
    return %c0_i32, %c0_i32_0 : i32, i32
  }
  func.func @transform_4(%arg0: i32) -> (i32, i32) {
    %c0_i32 = arith.constant 0 : i32
    %c0_i32_0 = arith.constant 0 : i32
    %c0_i32_1 = arith.constant 0 : i32
    return %c0_i32, %c0_i32_0 : i32, i32
  }
  func.func @transform_5(%arg0: i32) -> (i32, i32) {
    %c0_i32 = arith.constant 0 : i32
    %c0_i32_0 = arith.constant 0 : i32
    %c0_i32_1 = arith.constant 0 : i32
    return %c0_i32, %c0_i32_0 : i32, i32
  }
  func.func @transform_6(%arg0: i32) -> (i32, i32) {
    %c0_i32 = arith.constant 0 : i32
    %c0_i32_0 = arith.constant 0 : i32
    %c0_i32_1 = arith.constant 0 : i32
    return %c0_i32, %c0_i32_0 : i32, i32
  }
  func.func @transform_7(%arg0: i32) -> (i32, i32) {
    %c0_i32 = arith.constant 0 : i32
    %c0_i32_0 = arith.constant 0 : i32
    return %arg0, %c0_i32 : i32, i32
  }
}

</mosaic_0001>

<llo_original>
// kernel: tpu_custom_call.1
$region0: #{tpu_custom_call.1}
  #allocation0 [shape = 'u32[]', space=smem, size = 0x4, offset = 0x4, fixed_abs, tag = 'smem constant byte address 0x4 - core index']
  #allocation1 [shape = 'u32[144,128]{1,0:T(1,128)}', space=vmem, size = 0x12000, scoped, tag = 'internal scratch']
  %s0 = inlined_call_operand.vmem [shape: f32[8,1], index: 0, kind: input, shape index: {}]
  %s1 = inlined_call_operand.vmem [shape: f32[1,32], index: 1, kind: input, shape index: {}]
  %s2 = inlined_call_operand.hbm [shape: f32[32,256], index: 2, kind: input, shape index: {}]
  %s3 = inlined_call_operand.hbm [shape: f32[32,256], index: 3, kind: input, shape index: {}]
  %s4 = inlined_call_operand.vmem [shape: f32[1,256], index: 4, kind: input, shape index: {}]
  %s5 = inlined_call_operand.hbm [shape: f32[256,256], index: 5, kind: input, shape index: {}]
  %s6 = inlined_call_operand.vmem [shape: f32[1,256], index: 6, kind: input, shape index: {}]
  %s7 = inlined_call_operand.hbm [shape: f32[8,256], index: 7, kind: output, shape index: {}]
  %s8 = sld [smem:[#allocation0]]
  $region50: #{tpu_custom_call.1} parent=0
    _
  %s10 = ssub.s32 1, %s8
  %s11 = scalar_select 0, %s10, %s8
  $region1: #{tpu_custom_call.1} parent=0
    #allocation2 [shape = 'u8[32768]{0}', space=vmem, size = 0x8000, scoped, tag = 'input window, operand 2, single buffered']
    #allocation3 [shape = 's32[1]{0}', space=sflag, size = 0x4, scoped, tag = 'scoped memory for tpu_custom_call.1']
    #allocation4 [shape = 's32[1]{0}', space=sflag, size = 0x4, scoped, tag = 'scoped memory for tpu_custom_call.1']
    #allocation5 [shape = 'u8[32768]{0}', space=vmem, size = 0x8000, scoped, tag = 'input window, operand 3, single buffered']
    #allocation6 [shape = 's32[1]{0}', space=sflag, size = 0x4, scoped, tag = 'scoped memory for tpu_custom_call.1']
    #allocation7 [shape = 'u8[262144]{0}', space=vmem, size = 0x40000, scoped, tag = 'input window, operand 5, single buffered']
    #allocation8 [shape = 'u8[8192]{0}', space=vmem, size = 0x2000, scoped, tag = 'output window, operand 0, single buffered']
    %12 = vsyncpa [#allocation3], 0
    %13 = vsyncpa [#allocation6], 0
    %14 = vsyncpa [#allocation4], 0
    // Predicated region
    $region2: #{tpu_custom_call.1} parent=1 // pred_check
      _
    $region3: #{tpu_custom_call.1} parent=1 // pred_check_branch
      %16 = sbr.rel (0) target = $region5
    $region4: #{tpu_custom_call.1} parent=1 // pred_region
      _
    $region5: #{tpu_custom_call.1} parent=1 // pred_fallthru
      _
    // Predicated region
    $region6: #{tpu_custom_call.1} parent=1 // pred_check
      _
    $region7: #{tpu_custom_call.1} parent=1 // pred_check_branch
      %18 = sbr.rel (0) target = $region9
    $region8: #{tpu_custom_call.1} parent=1 // pred_region
      _
    $region9: #{tpu_custom_call.1} parent=1 // pred_fallthru
      _
    // Predicated region
    $region10: #{tpu_custom_call.1} parent=1 // pred_check
      _
    $region11: #{tpu_custom_call.1} parent=1 // pred_check_branch
      %20 = sbr.rel (0) target = $region13
    $region12: #{tpu_custom_call.1} parent=1 // pred_region
      %s22 = ssub.s32 1024, 1024
      %23 = vsyncadd [#allocation3], %s22
      %s24 = sshll.u32 [#allocation2], 4
      %s25 = int_to_ptr.vmem [resolvable:$true] %s24
      %30 = dma.hbm_to_vmem [thread:$0]  %s2, 1024, %s25, [#allocation3], 256, 256, 16
    $region13: #{tpu_custom_call.1} parent=1 // pred_fallthru
      _
    // Predicated region
    $region14: #{tpu_custom_call.1} parent=1 // pred_check
      _
    $region15: #{tpu_custom_call.1} parent=1 // pred_check_branch
      %32 = sbr.rel (0) target = $region17
    $region16: #{tpu_custom_call.1} parent=1 // pred_region
      %s34 = ssub.s32 1024, 1024
      %35 = vsyncadd [#allocation6], %s34
      %s36 = sshll.u32 [#allocation5], 4
      %s37 = int_to_ptr.vmem [resolvable:$true] %s36
      %42 = dma.hbm_to_vmem [thread:$0]  %s3, 1024, %s37, [#allocation6], 256, 256, 16
    $region17: #{tpu_custom_call.1} parent=1 // pred_fallthru
      _
    // Predicated region
    $region18: #{tpu_custom_call.1} parent=1 // pred_check
      _
    $region19: #{tpu_custom_call.1} parent=1 // pred_check_branch
      %44 = sbr.rel (0) target = $region21
    $region20: #{tpu_custom_call.1} parent=1 // pred_region
      _
    $region21: #{tpu_custom_call.1} parent=1 // pred_fallthru
      _
    // Predicated region
    $region22: #{tpu_custom_call.1} parent=1 // pred_check
      _
    $region23: #{tpu_custom_call.1} parent=1 // pred_check_branch
      %46 = sbr.rel (0) target = $region25
    $region24: #{tpu_custom_call.1} parent=1 // pred_region
      %s48 = ssub.s32 8192, 8192
      %49 = vsyncadd [#allocation6], %s48
      %s50 = sshll.u32 [#allocation7], 4
      %s51 = int_to_ptr.vmem [resolvable:$true] %s50
      %56 = dma.hbm_to_vmem [thread:$0]  %s5, 8192, %s51, [#allocation6], 256, 256, 16
    $region25: #{tpu_custom_call.1} parent=1 // pred_fallthru
      _
    // Predicated region
    $region26: #{tpu_custom_call.1} parent=1 // pred_check
      _
    $region27: #{tpu_custom_call.1} parent=1 // pred_check_branch
      %58 = sbr.rel (0) target = $region29
    $region28: #{tpu_custom_call.1} parent=1 // pred_region
      _
    $region29: #{tpu_custom_call.1} parent=1 // pred_fallthru
      _
    // Predicated region
    $region30: #{tpu_custom_call.1} parent=1 // pred_check
      _
    $region31: #{tpu_custom_call.1} parent=1 // pred_check_branch
      %60 = sbr.rel (0) target = $region33
    $region32: #{tpu_custom_call.1} parent=1 // pred_region
      %61 = dma.done [#allocation3], 1024
    $region33: #{tpu_custom_call.1} parent=1 // pred_fallthru
      _
    // Predicated region
    $region34: #{tpu_custom_call.1} parent=1 // pred_check
      _
    $region35: #{tpu_custom_call.1} parent=1 // pred_check_branch
      %63 = sbr.rel (0) target = $region37
    $region36: #{tpu_custom_call.1} parent=1 // pred_region
      %64 = dma.done [#allocation6], 1024
    $region37: #{tpu_custom_call.1} parent=1 // pred_fallthru
      _
    // Predicated region
    $region38: #{tpu_custom_call.1} parent=1 // pred_check
      _
    $region39: #{tpu_custom_call.1} parent=1 // pred_check_branch
      %66 = sbr.rel (0) target = $region41
    $region40: #{tpu_custom_call.1} parent=1 // pred_region
      %67 = dma.done [#allocation6], 8192
    $region41: #{tpu_custom_call.1} parent=1 // pred_fallthru
      _
    %v68 = vld [vmem:[%s0] sm:$0xff]
    %v69 = vld [vmem:[%s1] sm:$0x1]
    %71 = vset.pattern.permute.xlu0 0
    %72 = vperm.xlu0 %71, %v68
    %v73 = vpop.permute.xlu0 %72
    %v76 = vlaneseq
    %v77 = vshrl.u32 %v76, 7
    %v78 = vsub.s32 0, %v77
    %v79 = vrot.slane %v69, %v78
    %v81 = vmul.f32 %v73, %v79
    %v82 = vand.u32 2147483647, %v81
    %vm83 = vcmp.le.f32.partialorder %v82, 0.7853982
    %vm84 = vcmp.lt.s32.totalorder %v81, 0
    %v85 = vand.u32 %v81, 2139095040
    %v86 = vshrl.u32 %v85, 23
    %v87 = vsub.s32 %v86, 127
    %v88 = vand.u32 2147483647, %v81
    %v89 = vand.u32 %v88, 8388607
    %v90 = vor.u32 %v89, 8388608
    %v91 = vsub.s32 0, %v90
    %v92 = vadd.s32 %v87, 1
    %vm93 = vcmp.gt.s32.totalorder %v92, 0
    %v94 = vsel %vm93, %v92, 0
    %v95 = vshrl.u32 %v94, 5
    %v96 = vand.u32 %v94, 31
    %v97 = vsub.s32 32, %v96
    %v98 = vshrl.u32 683565275, %v97
    %v99 = vshll.u32 683565275, %v96
    %v100 = vshrl.u32 2475754826, %v97
    %v101 = vor.u32 %v99, %v100
    %v102 = vshll.u32 2475754826, %v96
    %v103 = vshrl.u32 2131351028, %v97
    %v104 = vor.u32 %v102, %v103
    %v105 = vshll.u32 2131351028, %v96
    %v106 = vshrl.u32 2102212464, %v97
    %v107 = vor.u32 %v105, %v106
    %v108 = vshll.u32 2102212464, %v96
    %v109 = vshrl.u32 920167782, %v97
    %v110 = vor.u32 %v108, %v109
    %v111 = vshll.u32 920167782, %v96
    %v112 = vshrl.u32 1326507024, %v97
    %v113 = vor.u32 %v111, %v112
    %vm114 = vcmp.lt.s32.totalorder %v95, 1
    %vm115 = vcmp.lt.s32.totalorder %v95, 2
    %vm116 = vcmp.lt.s32.totalorder %v95, 3
    %vm117 = vcmp.lt.s32.totalorder %v95, 4
    %v118 = vsel %vm114, %v98, %v101
    %v119 = vsel %vm117, %v107, 2102212464
    %v120 = vsel %vm116, %v104, %v119
    %v121 = vsel %vm115, %v118, %v120
    %v122 = vsel %vm114, %v101, %v104
    %v123 = vsel %vm117, %v110, 920167782
    %v124 = vsel %vm116, %v107, %v123
    %v125 = vsel %vm115, %v122, %v124
    %v126 = vsel %vm114, %v104, %v107
    %v127 = vsel %vm117, %v113, 1326507024
    %v128 = vsel %vm116, %v110, %v127
    %v129 = vsel %vm115, %v126, %v128
    %v130 = vshll.u32 %v90, 8
    %v131 = vmul.u32.u64.compose %v130, %v129
    %v132 = vextract.low.u32 %v131
    %v133 = vextract.high.u32 %v131
    %v134 = vmul.u32.u64.compose %v130, %v125
    %v135 = vextract.low.u32 %v134
    %v136 = vextract.high.u32 %v134
    %v137 = vmul.u32 %v130, %v121
    %v138 = vadd.s32 %v133, %v135
    %vm139 = vc.u32 %v133, %v135
    %v140 = vadd.s32 %v136, 1
    %v141 = vsel %vm139, %v140, %v136
    %v142 = vadd.s32 %v137, %v141
    %v143 = vadd.s32 %v142, 536870912
    %v144 = vshrl.u32 %v143, 30
    %v145 = vshll.u32 %v144, 30
    %v146 = vsub.s32 %v142, %v145
    %vm147 = vcmp.lt.s32.totalorder %v146, 0
    %v148 = vsub.s32 0, %v146
    %v149 = vsel %vm147, %v148, %v146
    %v150 = vclz %v149
    %v151 = vsub.s32 %v150, 2
    %vm152 = vcmp.gt.s32.totalorder 0, %v151
    %v153 = vsel %vm152, 0, %v151
    %v154 = vsub.s32 32, %v153
    %v155 = vshll.u32 %v146, %v153
    %v156 = vshrl.u32 %v138, %v154
    %v157 = vor.u32 %v155, %v156
    %v158 = vsub.s32 4294967266, %v153
    %v159 = vadd.s32 %v158, 127
    %v160 = vshll.u32 %v159, 23
    %v161 = vor.u32 4788187, %v160
    %v162 = vand.u32 2147483647, %v161
    %v164 = vcvt.s32.f32 %v157
    %v165 = vmul.f32 %v164, %v162
    %v166 = vxor.u32 %v165, 2147483648
    %v167 = vsel %vm84, %v166, %v165
    %v168 = vsub.s32 4, %v144
    %v169 = vsel %vm84, %v168, %v144
    %v170 = vsel %vm83, %v81, %v167
    %v171 = vsel %vm83, 0, %v169
    %v172 = vcosq.f32.pop %v170
    %v173 = vsinq.f32.pop %v170
    %vm174 = vweird.f32 %v81
    %v175 = vadd.s32 %v171, 3
    %v176 = vand.u32 %v175, 3
    %vm177 = vcmp.lt.s32.totalorder %v176, 2
    %vm178 = vcmp.eq.s32.totalorder %v176, 0
    %v179 = vxor.u32 %v173, 2147483648
    %v180 = vsel %vm178, %v172, %v179
    %vm181 = vcmp.eq.s32.totalorder %v176, 2
    %v182 = vxor.u32 %v172, 2147483648
    %v183 = vsel %vm181, %v182, %v173
    %v184 = vsel %vm177, %v180, %v183
    %v185 = vsel %vm174, nan, %v184
    %v186 = vand.u32 2147483647, %v81
    %vm187 = vcmp.le.f32.partialorder %v186, 0.7853982
    %vm188 = vcmp.lt.s32.totalorder %v81, 0
    %v189 = vand.u32 %v81, 2139095040
    %v190 = vshrl.u32 %v189, 23
    %v191 = vsub.s32 %v190, 127
    %v192 = vand.u32 2147483647, %v81
    %v193 = vand.u32 %v192, 8388607
    %v194 = vor.u32 %v193, 8388608
    %v195 = vsub.s32 0, %v194
    %v196 = vadd.s32 %v191, 1
    %vm197 = vcmp.gt.s32.totalorder %v196, 0
    %v198 = vsel %vm197, %v196, 0
    %v199 = vshrl.u32 %v198, 5
    %v200 = vand.u32 %v198, 31
    %v201 = vsub.s32 32, %v200
    %v202 = vshrl.u32 683565275, %v201
    %v203 = vshll.u32 683565275, %v200
    %v204 = vshrl.u32 2475754826, %v201
    %v205 = vor.u32 %v203, %v204
    %v206 = vshll.u32 2475754826, %v200
    %v207 = vshrl.u32 2131351028, %v201
    %v208 = vor.u32 %v206, %v207
    %v209 = vshll.u32 2131351028, %v200
    %v210 = vshrl.u32 2102212464, %v201
    %v211 = vor.u32 %v209, %v210
    %v212 = vshll.u32 2102212464, %v200
    %v213 = vshrl.u32 920167782, %v201
    %v214 = vor.u32 %v212, %v213
    %v215 = vshll.u32 920167782, %v200
    %v216 = vshrl.u32 1326507024, %v201
    %v217 = vor.u32 %v215, %v216
    %vm218 = vcmp.lt.s32.totalorder %v199, 1
    %vm219 = vcmp.lt.s32.totalorder %v199, 2
    %vm220 = vcmp.lt.s32.totalorder %v199, 3
    %vm221 = vcmp.lt.s32.totalorder %v199, 4
    %v222 = vsel %vm218, %v202, %v205
    %v223 = vsel %vm221, %v211, 2102212464
    %v224 = vsel %vm220, %v208, %v223
    %v225 = vsel %vm219, %v222, %v224
    %v226 = vsel %vm218, %v205, %v208
    %v227 = vsel %vm221, %v214, 920167782
    %v228 = vsel %vm220, %v211, %v227
    %v229 = vsel %vm219, %v226, %v228
    %v230 = vsel %vm218, %v208, %v211
    %v231 = vsel %vm221, %v217, 1326507024
    %v232 = vsel %vm220, %v214, %v231
    %v233 = vsel %vm219, %v230, %v232
    %v234 = vshll.u32 %v194, 8
    %v235 = vmul.u32.u64.compose %v234, %v233
    %v236 = vextract.low.u32 %v235
    %v237 = vextract.high.u32 %v235
    %v238 = vmul.u32.u64.compose %v234, %v229
    %v239 = vextract.low.u32 %v238
    %v240 = vextract.high.u32 %v238
    %v241 = vmul.u32 %v234, %v225
    %v242 = vadd.s32 %v237, %v239
    %vm243 = vc.u32 %v237, %v239
    %v244 = vadd.s32 %v240, 1
    %v245 = vsel %vm243, %v244, %v240
    %v246 = vadd.s32 %v241, %v245
    %v247 = vadd.s32 %v246, 536870912
    %v248 = vshrl.u32 %v247, 30
    %v249 = vshll.u32 %v248, 30
    %v250 = vsub.s32 %v246, %v249
    %vm251 = vcmp.lt.s32.totalorder %v250, 0
    %v252 = vsub.s32 0, %v250
    %v253 = vsel %vm251, %v252, %v250
    %v254 = vclz %v253
    %v255 = vsub.s32 %v254, 2
    %vm256 = vcmp.gt.s32.totalorder 0, %v255
    %v257 = vsel %vm256, 0, %v255
    %v258 = vsub.s32 32, %v257
    %v259 = vshll.u32 %v250, %v257
    %v260 = vshrl.u32 %v242, %v258
    %v261 = vor.u32 %v259, %v260
    %v262 = vsub.s32 4294967266, %v257
    %v263 = vadd.s32 %v262, 127
    %v264 = vshll.u32 %v263, 23
    %v265 = vor.u32 4788187, %v264
    %v266 = vand.u32 2147483647, %v265
    %v268 = vcvt.s32.f32 %v261
    %v269 = vmul.f32 %v268, %v266
    %v270 = vxor.u32 %v269, 2147483648
    %v271 = vsel %vm188, %v270, %v269
    %v272 = vsub.s32 4, %v248
    %v273 = vsel %vm188, %v272, %v248
    %v274 = vsel %vm187, %v81, %v271
    %v275 = vsel %vm187, 0, %v273
    %v276 = vcosq.f32.pop %v274
    %v277 = vsinq.f32.pop %v274
    %vm278 = vweird.f32 %v81
    %v279 = vand.u32 %v275, 3
    %vm280 = vcmp.lt.s32.totalorder %v279, 2
    %vm281 = vcmp.eq.s32.totalorder %v279, 0
    %v282 = vxor.u32 %v277, 2147483648
    %v283 = vsel %vm281, %v276, %v282
    %vm284 = vcmp.eq.s32.totalorder %v279, 2
    %v285 = vxor.u32 %v276, 2147483648
    %v286 = vsel %vm284, %v285, %v277
    %v287 = vsel %vm280, %v283, %v286
    %v288 = vsel %vm278, nan, %v287
    %v289 = vld [vmem:[#allocation2] sm:$0xff]
    %v290 = vld [vmem:[#allocation2 + $0x8] sm:$0xff]
    %v291 = vld [vmem:[#allocation2 + $0x10] sm:$0xff]
    %v292 = vld [vmem:[#allocation2 + $0x18] sm:$0xff]
    %v293 = vld [vmem:[#allocation2 + $0x20] sm:$0xff]
    %v294 = vld [vmem:[#allocation2 + $0x28] sm:$0xff]
    %v295 = vld [vmem:[#allocation2 + $0x30] sm:$0xff]
    %v296 = vld [vmem:[#allocation2 + $0x38] sm:$0xff]
    %v297 = vld [vmem:[#allocation5] sm:$0xff]
    %v298 = vld [vmem:[#allocation5 + $0x8] sm:$0xff]
    %v299 = vld [vmem:[#allocation5 + $0x10] sm:$0xff]
    %v300 = vld [vmem:[#allocation5 + $0x18] sm:$0xff]
    %v301 = vld [vmem:[#allocation5 + $0x20] sm:$0xff]
    %v302 = vld [vmem:[#allocation5 + $0x28] sm:$0xff]
    %v303 = vld [vmem:[#allocation5 + $0x30] sm:$0xff]
    %v304 = vld [vmem:[#allocation5 + $0x38] sm:$0xff]
    %vm305 = vcmask 261120
    %v307 = vsel %vm305, %v288, 0
    %v309 = vand.u32 %v298, 4294901760
    %310 = vmatprep.subr.mxu0 %v309
    %v311 = vand.u32 %v297, 4294901760
    %312 = vmatpush1.msra.mxu0 %v311
    %v313 = vand.u32 %v300, 4294901760
    %314 = vmatprep.subr.mxu0 %v313
    %v315 = vand.u32 %v299, 4294901760
    %316 = vmatpush1.msra.mxu0 %v315
    %v317 = vand.u32 %v302, 4294901760
    %318 = vmatprep.subr.mxu0 %v317
    %v319 = vand.u32 %v301, 4294901760
    %320 = vmatpush1.msra.mxu0 %v319
    %v321 = vand.u32 %v304, 4294901760
    %322 = vmatprep.subr.mxu0 %v321
    %v323 = vand.u32 %v303, 4294901760
    %324 = vmatpush1.msra.mxu0 %v323
    %325 = vmatprep.subr.mxu0 0.0
    %326 = vmatpush1.msra.mxu0 0.0
    %327 = vmatprep.subr.mxu0 0.0
    %328 = vmatpush1.msra.mxu0 0.0
    %329 = vmatprep.subr.mxu0 0.0
    %330 = vmatpush1.msra.mxu0 0.0
    %331 = vmatprep.subr.mxu0 0.0
    %332 = vmatpush1.msra.mxu0 0.0
    %333 = vmatprep.subr.mxu0 0.0
    %334 = vmatpush1.msra.mxu0 0.0
    %335 = vmatprep.subr.mxu0 0.0
    %336 = vmatpush1.msra.mxu0 0.0
    %337 = vmatprep.subr.mxu0 0.0
    %338 = vmatpush1.msra.mxu0 0.0
    %339 = vmatprep.subr.mxu0 0.0
    %340 = vmatpush1.msra.mxu0 0.0
    %341 = vmatprep.subr.mxu0 0.0
    %342 = vmatpush1.msra.mxu0 0.0
    %343 = vmatprep.subr.mxu0 0.0
    %344 = vmatpush1.msra.mxu0 0.0
    %345 = vmatprep.subr.mxu0 0.0
    %346 = vmatpush1.msra.mxu0 0.0
    %347 = vmatprep.subr.mxu0 0.0
    %348 = vmatpush1.msra.mxu0 0.0
    %349 = vmatprep.subr.mxu0 0.0
    %350 = vmatpush1.msra.mxu0 0.0
    %351 = vmatprep.subr.mxu0 0.0
    %352 = vmatpush1.msra.mxu0 0.0
    %353 = vmatprep.subr.mxu0 0.0
    %354 = vmatpush1.msra.mxu0 0.0
    %355 = vmatprep.subr.mxu0 0.0
    %356 = vmatpush1.msra.mxu0 0.0
    %357 = vmatprep.subr.mxu0 0.0
    %358 = vmatpush1.msra.mxu0 0.0
    %359 = vmatprep.subr.mxu0 0.0
    %360 = vmatpush1.msra.mxu0 0.0
    %361 = vmatprep.subr.mxu0 0.0
    %362 = vmatpush1.msra.mxu0 0.0
    %363 = vmatprep.subr.mxu0 0.0
    %364 = vmatpush1.msra.mxu0 0.0
    %365 = vmatprep.subr.mxu0 0.0
    %366 = vmatpush1.msra.mxu0 0.0
    %367 = vmatprep.subr.mxu0 0.0
    %368 = vmatpush1.msra.mxu0 0.0
    %369 = vmatprep.subr.mxu0 0.0
    %370 = vmatpush1.msra.mxu0 0.0
    %371 = vmatprep.subr.mxu0 0.0
    %372 = vmatpush1.msra.mxu0 0.0
    %373 = vmatprep.subr.mxu0 0.0
    %374 = vmatpush1.msra.mxu0 0.0
    %375 = vmatprep.subr.mxu0 0.0
    %376 = vmatpush1.msra.mxu0 0.0
    %377 = vmatprep.subr.mxu0 0.0
    %378 = vmatpush1.msra.mxu0 0.0
    %379 = vmatprep.subr.mxu0 0.0
    %380 = vmatpush1.msra.mxu0 0.0
    %381 = vmatprep.mubr.f32.mxu0 0.0
    %v382 = vand.u32 %v307, 4294901760
    %v383 = vsub.f32 %v307, %v382
    %v384 = vand.u32 %v383, 4294901760
    %v385 = vsub.f32 %v383, %v384
    %v386 = vand.u32 %v385, 4294901760
    %387 = vmatmul.mubr.f32.gmra.mrb[0].mxu0 %v386
    %v388 = vpop.f32.mrb[0].mxu0
    %v389 = vadd.f32 0.0, %v388
    %v390 = vpop.f32.mrb[0].mxu0
    %v391 = vadd.f32 0.0, %v390
    %392 = vdwg.mxu0
    %v393 = vand.u32 %v298, 4294901760
    %v394 = vsub.f32 %v298, %v393
    %v395 = vand.u32 %v394, 4294901760
    %v396 = vsub.f32 %v394, %v395
    %v397 = vand.u32 %v396, 4294901760
    %398 = vmatprep.subr.mxu0 %v397
    %v399 = vand.u32 %v297, 4294901760
    %v400 = vsub.f32 %v297, %v399
    %v401 = vand.u32 %v400, 4294901760
    %v402 = vsub.f32 %v400, %v401
    %v403 = vand.u32 %v402, 4294901760
    %404 = vmatpush1.msra.mxu0 %v403
    %v405 = vand.u32 %v300, 4294901760
    %v406 = vsub.f32 %v300, %v405
    %v407 = vand.u32 %v406, 4294901760
    %v408 = vsub.f32 %v406, %v407
    %v409 = vand.u32 %v408, 4294901760
    %410 = vmatprep.subr.mxu0 %v409
    %v411 = vand.u32 %v299, 4294901760
    %v412 = vsub.f32 %v299, %v411
    %v413 = vand.u32 %v412, 4294901760
    %v414 = vsub.f32 %v412, %v413
    %v415 = vand.u32 %v414, 4294901760
    %416 = vmatpush1.msra.mxu0 %v415
    %v417 = vand.u32 %v302, 4294901760
    %v418 = vsub.f32 %v302, %v417
    %v419 = vand.u32 %v418, 4294901760
    %v420 = vsub.f32 %v418, %v419
    %v421 = vand.u32 %v420, 4294901760
    %422 = vmatprep.subr.mxu0 %v421
    %v423 = vand.u32 %v301, 4294901760
    %v424 = vsub.f32 %v301, %v423
    %v425 = vand.u32 %v424, 4294901760
    %v426 = vsub.f32 %v424, %v425
    %v427 = vand.u32 %v426, 4294901760
    %428 = vmatpush1.msra.mxu0 %v427
    %v429 = vand.u32 %v304, 4294901760
    %v430 = vsub.f32 %v304, %v429
    %v431 = vand.u32 %v430, 4294901760
    %v432 = vsub.f32 %v430, %v431
    %v433 = vand.u32 %v432, 4294901760
    %434 = vmatprep.subr.mxu0 %v433
    %v435 = vand.u32 %v303, 4294901760
    %v436 = vsub.f32 %v303, %v435
    %v437 = vand.u32 %v436, 4294901760
    %v438 = vsub.f32 %v436, %v437
    %v439 = vand.u32 %v438, 4294901760
    %440 = vmatpush1.msra.mxu0 %v439
    %441 = vmatprep.subr.mxu0 0.0
    %442 = vmatpush1.msra.mxu0 0.0
    %443 = vmatprep.subr.mxu0 0.0
    %444 = vmatpush1.msra.mxu0 0.0
    %445 = vmatprep.subr.mxu0 0.0
    %446 = vmatpush1.msra.mxu0 0.0
    %447 = vmatprep.subr.mxu0 0.0
    %448 = vmatpush1.msra.mxu0 0.0
    %449 = vmatprep.subr.mxu0 0.0
    %450 = vmatpush1.msra.mxu0 0.0
    %451 = vmatprep.subr.mxu0 0.0
    %452 = vmatpush1.msra.mxu0 0.0
    %453 = vmatprep.subr.mxu0 0.0
    %454 = vmatpush1.msra.mxu0 0.0
    %455 = vmatprep.subr.mxu0 0.0
    %456 = vmatpush1.msra.mxu0 0.0
    %457 = vmatprep.subr.mxu0 0.0
    %458 = vmatpush1.msra.mxu0 0.0
    %459 = vmatprep.subr.mxu0 0.0
    %460 = vmatpush1.msra.mxu0 0.0
    %461 = vmatprep.subr.mxu0 0.0
    %462 = vmatpush1.msra.mxu0 0.0
    %463 = vmatprep.subr.mxu0 0.0
    %464 = vmatpush1.msra.mxu0 0.0
    %465 = vmatprep.subr.mxu0 0.0
    %466 = vmatpush1.msra.mxu0 0.0
    %467 = vmatprep.subr.mxu0 0.0
    %468 = vmatpush1.msra.mxu0 0.0
    %469 = vmatprep.subr.mxu0 0.0
    %470 = vmatpush1.msra.mxu0 0.0
    %471 = vmatprep.subr.mxu0 0.0
    %472 = vmatpush1.msra.mxu0 0.0
    %473 = vmatprep.subr.mxu0 0.0
    %474 = vmatpush1.msra.mxu0 0.0
    %475 = vmatprep.subr.mxu0 0.0
    %476 = vmatpush1.msra.mxu0 0.0
    %477 = vmatprep.subr.mxu0 0.0
    %478 = vmatpush1.msra.mxu0 0.0
    %479 = vmatprep.subr.mxu0 0.0
    %480 = vmatpush1.msra.mxu0 0.0
    %481 = vmatprep.subr.mxu0 0.0
    %482 = vmatpush1.msra.mxu0 0.0
    %483 = vmatprep.subr.mxu0 0.0
    %484 = vmatpush1.msra.mxu0 0.0
    %485 = vmatprep.subr.mxu0 0.0
    %486 = vmatpush1.msra.mxu0 0.0
    %487 = vmatprep.subr.mxu0 0.0
    %488 = vmatpush1.msra.mxu0 0.0
    %489 = vmatprep.subr.mxu0 0.0
    %490 = vmatpush1.msra.mxu0 0.0
    %491 = vmatprep.subr.mxu0 0.0
    %492 = vmatpush1.msra.mxu0 0.0
    %493 = vmatprep.subr.mxu0 0.0
    %494 = vmatpush1.msra.mxu0 0.0
    %495 = vmatprep.subr.mxu0 0.0
    %496 = vmatpush1.msra.mxu0 0.0
    %497 = vmatprep.mubr.f32.mxu0 0.0
    %v498 = vand.u32 %v307, 4294901760
    %499 = vmatmul.mubr.f32.gmra.mrb[0].mxu0 %v498
    %v500 = vpop.f32.mrb[0].mxu0
    %v501 = vadd.f32 %v389, %v500
    %v502 = vpop.f32.mrb[0].mxu0
    %v503 = vadd.f32 %v391, %v502
    %504 = vdwg.mxu0
    %v505 = vand.u32 %v298, 4294901760
    %v506 = vsub.f32 %v298, %v505
    %507 = vmatprep.subr.mxu0 %v506
    %v508 = vand.u32 %v297, 4294901760
    %v509 = vsub.f32 %v297, %v508
    %510 = vmatpush1.msra.mxu0 %v509
    %v511 = vand.u32 %v300, 4294901760
    %v512 = vsub.f32 %v300, %v511
    %513 = vmatprep.subr.mxu0 %v512
    %v514 = vand.u32 %v299, 4294901760
    %v515 = vsub.f32 %v299, %v514
    %516 = vmatpush1.msra.mxu0 %v515
    %v517 = vand.u32 %v302, 4294901760
    %v518 = vsub.f32 %v302, %v517
    %519 = vmatprep.subr.mxu0 %v518
    %v520 = vand.u32 %v301, 4294901760
    %v521 = vsub.f32 %v301, %v520
    %522 = vmatpush1.msra.mxu0 %v521
    %v523 = vand.u32 %v304, 4294901760
    %v524 = vsub.f32 %v304, %v523
    %525 = vmatprep.subr.mxu0 %v524
    %v526 = vand.u32 %v303, 4294901760
    %v527 = vsub.f32 %v303, %v526
    %528 = vmatpush1.msra.mxu0 %v527
    %529 = vmatprep.subr.mxu0 0.0
    %530 = vmatpush1.msra.mxu0 0.0
    %531 = vmatprep.subr.mxu0 0.0
    %532 = vmatpush1.msra.mxu0 0.0
    %533 = vmatprep.subr.mxu0 0.0
    %534 = vmatpush1.msra.mxu0 0.0
    %535 = vmatprep.subr.mxu0 0.0
    %536 = vmatpush1.msra.mxu0 0.0
    %537 = vmatprep.subr.mxu0 0.0
    %538 = vmatpush1.msra.mxu0 0.0
    %539 = vmatprep.subr.mxu0 0.0
    %540 = vmatpush1.msra.mxu0 0.0
    %541 = vmatprep.subr.mxu0 0.0
    %542 = vmatpush1.msra.mxu0 0.0
    %543 = vmatprep.subr.mxu0 0.0
    %544 = vmatpush1.msra.mxu0 0.0
    %545 = vmatprep.subr.mxu0 0.0
    %546 = vmatpush1.msra.mxu0 0.0
    %547 = vmatprep.subr.mxu0 0.0
    %548 = vmatpush1.msra.mxu0 0.0
    %549 = vmatprep.subr.mxu0 0.0
    %550 = vmatpush1.msra.mxu0 0.0
    %551 = vmatprep.subr.mxu0 0.0
    %552 = vmatpush1.msra.mxu0 0.0
    %553 = vmatprep.subr.mxu0 0.0
    %554 = vmatpush1.msra.mxu0 0.0
    %555 = vmatprep.subr.mxu0 0.0
    %556 = vmatpush1.msra.mxu0 0.0
    %557 = vmatprep.subr.mxu0 0.0
    %558 = vmatpush1.msra.mxu0 0.0
    %559 = vmatprep.subr.mxu0 0.0
    %560 = vmatpush1.msra.mxu0 0.0
    %561 = vmatprep.subr.mxu0 0.0
    %562 = vmatpush1.msra.mxu0 0.0
    %563 = vmatprep.subr.mxu0 0.0
    %564 = vmatpush1.msra.mxu0 0.0
    %565 = vmatprep.subr.mxu0 0.0
    %566 = vmatpush1.msra.mxu0 0.0
    %567 = vmatprep.subr.mxu0 0.0
    %568 = vmatpush1.msra.mxu0 0.0
    %569 = vmatprep.subr.mxu0 0.0
    %570 = vmatpush1.msra.mxu0 0.0
    %571 = vmatprep.subr.mxu0 0.0
    %572 = vmatpush1.msra.mxu0 0.0
    %573 = vmatprep.subr.mxu0 0.0
    %574 = vmatpush1.msra.mxu0 0.0
    %575 = vmatprep.subr.mxu0 0.0
    %576 = vmatpush1.msra.mxu0 0.0
    %577 = vmatprep.subr.mxu0 0.0
    %578 = vmatpush1.msra.mxu0 0.0
    %579 = vmatprep.subr.mxu0 0.0
    %580 = vmatpush1.msra.mxu0 0.0
    %581 = vmatprep.subr.mxu0 0.0
    %582 = vmatpush1.msra.mxu0 0.0
    %583 = vmatprep.subr.mxu0 0.0
    %584 = vmatpush1.msra.mxu0 0.0
    %585 = vmatprep.mubr.f32.mxu0 0.0
    %v586 = vand.u32 %v307, 4294901760
    %v587 = vsub.f32 %v307, %v586
    %588 = vmatmul.mubr.f32.gmra.mrb[0].mxu0 %v587
    %v589 = vpop.f32.mrb[0].mxu0
    %v590 = vadd.f32 %v501, %v589
    %v591 = vpop.f32.mrb[0].mxu0
    %v592 = vadd.f32 %v503, %v591
    %593 = vdwg.mxu0
    %v594 = vand.u32 %v298, 4294901760
    %595 = vmatprep.subr.mxu0 %v594
    %v596 = vand.u32 %v297, 4294901760
    %597 = vmatpush1.msra.mxu0 %v596
    %v598 = vand.u32 %v300, 4294901760
    %599 = vmatprep.subr.mxu0 %v598
    %v600 = vand.u32 %v299, 4294901760
    %601 = vmatpush1.msra.mxu0 %v600
    %v602 = vand.u32 %v302, 4294901760
    %603 = vmatprep.subr.mxu0 %v602
    %v604 = vand.u32 %v301, 4294901760
    %605 = vmatpush1.msra.mxu0 %v604
    %v606 = vand.u32 %v304, 4294901760
    %607 = vmatprep.subr.mxu0 %v606
    %v608 = vand.u32 %v303, 4294901760
    %609 = vmatpush1.msra.mxu0 %v608
    %610 = vmatprep.subr.mxu0 0.0
    %611 = vmatpush1.msra.mxu0 0.0
    %612 = vmatprep.subr.mxu0 0.0
    %613 = vmatpush1.msra.mxu0 0.0
    %614 = vmatprep.subr.mxu0 0.0
    %615 = vmatpush1.msra.mxu0 0.0
    %616 = vmatprep.subr.mxu0 0.0
    %617 = vmatpush1.msra.mxu0 0.0
    %618 = vmatprep.subr.mxu0 0.0
    %619 = vmatpush1.msra.mxu0 0.0
    %620 = vmatprep.subr.mxu0 0.0
    %621 = vmatpush1.msra.mxu0 0.0
    %622 = vmatprep.subr.mxu0 0.0
    %623 = vmatpush1.msra.mxu0 0.0
    %624 = vmatprep.subr.mxu0 0.0
    %625 = vmatpush1.msra.mxu0 0.0
    %626 = vmatprep.subr.mxu0 0.0
    %627 = vmatpush1.msra.mxu0 0.0
    %628 = vmatprep.subr.mxu0 0.0
    %629 = vmatpush1.msra.mxu0 0.0
    %630 = vmatprep.subr.mxu0 0.0
    %631 = vmatpush1.msra.mxu0 0.0
    %632 = vmatprep.subr.mxu0 0.0
    %633 = vmatpush1.msra.mxu0 0.0
    %634 = vmatprep.subr.mxu0 0.0
    %635 = vmatpush1.msra.mxu0 0.0
    %636 = vmatprep.subr.mxu0 0.0
    %637 = vmatpush1.msra.mxu0 0.0
    %638 = vmatprep.subr.mxu0 0.0
    %639 = vmatpush1.msra.mxu0 0.0
    %640 = vmatprep.subr.mxu0 0.0
    %641 = vmatpush1.msra.mxu0 0.0
    %642 = vmatprep.subr.mxu0 0.0
    %643 = vmatpush1.msra.mxu0 0.0
    %644 = vmatprep.subr.mxu0 0.0
    %645 = vmatpush1.msra.mxu0 0.0
    %646 = vmatprep.subr.mxu0 0.0
    %647 = vmatpush1.msra.mxu0 0.0
    %648 = vmatprep.subr.mxu0 0.0
    %649 = vmatpush1.msra.mxu0 0.0
    %650 = vmatprep.subr.mxu0 0.0
    %651 = vmatpush1.msra.mxu0 0.0
    %652 = vmatprep.subr.mxu0 0.0
    %653 = vmatpush1.msra.mxu0 0.0
    %654 = vmatprep.subr.mxu0 0.0
    %655 = vmatpush1.msra.mxu0 0.0
    %656 = vmatprep.subr.mxu0 0.0
    %657 = vmatpush1.msra.mxu0 0.0
    %658 = vmatprep.subr.mxu0 0.0
    %659 = vmatpush1.msra.mxu0 0.0
    %660 = vmatprep.subr.mxu0 0.0
    %661 = vmatpush1.msra.mxu0 0.0
    %662 = vmatprep.subr.mxu0 0.0
    %663 = vmatpush1.msra.mxu0 0.0
    %664 = vmatprep.subr.mxu0 0.0
    %665 = vmatpush1.msra.mxu0 0.0
    %666 = vmatprep.mubr.f32.mxu0 0.0
    %v667 = vand.u32 %v307, 4294901760
    %v668 = vsub.f32 %v307, %v667
    %v669 = vand.u32 %v668, 4294901760
    %670 = vmatmul.mubr.f32.gmra.mrb[0].mxu0 %v669
    %v671 = vpop.f32.mrb[0].mxu0
    %v672 = vadd.f32 %v590, %v671
    %v673 = vpop.f32.mrb[0].mxu0
    %v674 = vadd.f32 %v592, %v673
    %675 = vdwg.mxu0
    %v676 = vand.u32 %v298, 4294901760
    %v677 = vsub.f32 %v298, %v676
    %v678 = vand.u32 %v677, 4294901760
    %679 = vmatprep.subr.mxu0 %v678
    %v680 = vand.u32 %v297, 4294901760
    %v681 = vsub.f32 %v297, %v680
    %v682 = vand.u32 %v681, 4294901760
    %683 = vmatpush1.msra.mxu0 %v682
    %v684 = vand.u32 %v300, 4294901760
    %v685 = vsub.f32 %v300, %v684
    %v686 = vand.u32 %v685, 4294901760
    %687 = vmatprep.subr.mxu0 %v686
    %v688 = vand.u32 %v299, 4294901760
    %v689 = vsub.f32 %v299, %v688
    %v690 = vand.u32 %v689, 4294901760
    %691 = vmatpush1.msra.mxu0 %v690
    %v692 = vand.u32 %v302, 4294901760
    %v693 = vsub.f32 %v302, %v692
    %v694 = vand.u32 %v693, 4294901760
    %695 = vmatprep.subr.mxu0 %v694
    %v696 = vand.u32 %v301, 4294901760
    %v697 = vsub.f32 %v301, %v696
    %v698 = vand.u32 %v697, 4294901760
    %699 = vmatpush1.msra.mxu0 %v698
    %v700 = vand.u32 %v304, 4294901760
    %v701 = vsub.f32 %v304, %v700
    %v702 = vand.u32 %v701, 4294901760
    %703 = vmatprep.subr.mxu0 %v702
    %v704 = vand.u32 %v303, 4294901760
    %v705 = vsub.f32 %v303, %v704
    %v706 = vand.u32 %v705, 4294901760
    %707 = vmatpush1.msra.mxu0 %v706
    %708 = vmatprep.subr.mxu0 0.0
    %709 = vmatpush1.msra.mxu0 0.0
    %710 = vmatprep.subr.mxu0 0.0
    %711 = vmatpush1.msra.mxu0 0.0
    %712 = vmatprep.subr.mxu0 0.0
    %713 = vmatpush1.msra.mxu0 0.0
    %714 = vmatprep.subr.mxu0 0.0
    %715 = vmatpush1.msra.mxu0 0.0
    %716 = vmatprep.subr.mxu0 0.0
    %717 = vmatpush1.msra.mxu0 0.0
    %718 = vmatprep.subr.mxu0 0.0
    %719 = vmatpush1.msra.mxu0 0.0
    %720 = vmatprep.subr.mxu0 0.0
    %721 = vmatpush1.msra.mxu0 0.0
    %722 = vmatprep.subr.mxu0 0.0
    %723 = vmatpush1.msra.mxu0 0.0
    %724 = vmatprep.subr.mxu0 0.0
    %725 = vmatpush1.msra.mxu0 0.0
    %726 = vmatprep.subr.mxu0 0.0
    %727 = vmatpush1.msra.mxu0 0.0
    %728 = vmatprep.subr.mxu0 0.0
    %729 = vmatpush1.msra.mxu0 0.0
    %730 = vmatprep.subr.mxu0 0.0
    %731 = vmatpush1.msra.mxu0 0.0
    %732 = vmatprep.subr.mxu0 0.0
    %733 = vmatpush1.msra.mxu0 0.0
    %734 = vmatprep.subr.mxu0 0.0
    %735 = vmatpush1.msra.mxu0 0.0
    %736 = vmatprep.subr.mxu0 0.0
    %737 = vmatpush1.msra.mxu0 0.0
    %738 = vmatprep.subr.mxu0 0.0
    %739 = vmatpush1.msra.mxu0 0.0
    %740 = vmatprep.subr.mxu0 0.0
    %741 = vmatpush1.msra.mxu0 0.0
    %742 = vmatprep.subr.mxu0 0.0
    %743 = vmatpush1.msra.mxu0 0.0
    %744 = vmatprep.subr.mxu0 0.0
    %745 = vmatpush1.msra.mxu0 0.0
    %746 = vmatprep.subr.mxu0 0.0
    %747 = vmatpush1.msra.mxu0 0.0
    %748 = vmatprep.subr.mxu0 0.0
    %749 = vmatpush1.msra.mxu0 0.0
    %750 = vmatprep.subr.mxu0 0.0
    %751 = vmatpush1.msra.mxu0 0.0
    %752 = vmatprep.subr.mxu0 0.0
    %753 = vmatpush1.msra.mxu0 0.0
    %754 = vmatprep.subr.mxu0 0.0
    %755 = vmatpush1.msra.mxu0 0.0
    %756 = vmatprep.subr.mxu0 0.0
    %757 = vmatpush1.msra.mxu0 0.0
    %758 = vmatprep.subr.mxu0 0.0
    %759 = vmatpush1.msra.mxu0 0.0
    %760 = vmatprep.subr.mxu0 0.0
    %761 = vmatpush1.msra.mxu0 0.0
    %762 = vmatprep.subr.mxu0 0.0
    %763 = vmatpush1.msra.mxu0 0.0
    %764 = vmatprep.mubr.f32.mxu0 0.0
    %v765 = vand.u32 %v307, 4294901760
    %766 = vmatmul.mubr.f32.gmra.mrb[0].mxu0 %v765
    %v767 = vpop.f32.mrb[0].mxu0
    %v768 = vadd.f32 %v672, %v767
    %v769 = vpop.f32.mrb[0].mxu0
    %v770 = vadd.f32 %v674, %v769
    %771 = vdwg.mxu0
    %v772 = vand.u32 %v298, 4294901760
    %773 = vmatprep.subr.mxu0 %v772
    %v774 = vand.u32 %v297, 4294901760
    %775 = vmatpush1.msra.mxu0 %v774
    %v776 = vand.u32 %v300, 4294901760
    %777 = vmatprep.subr.mxu0 %v776
    %v778 = vand.u32 %v299, 4294901760
    %779 = vmatpush1.msra.mxu0 %v778
    %v780 = vand.u32 %v302, 4294901760
    %781 = vmatprep.subr.mxu0 %v780
    %v782 = vand.u32 %v301, 4294901760
    %783 = vmatpush1.msra.mxu0 %v782
    %v784 = vand.u32 %v304, 4294901760
    %785 = vmatprep.subr.mxu0 %v784
    %v786 = vand.u32 %v303, 4294901760
    %787 = vmatpush1.msra.mxu0 %v786
    %788 = vmatprep.subr.mxu0 0.0
    %789 = vmatpush1.msra.mxu0 0.0
    %790 = vmatprep.subr.mxu0 0.0
    %791 = vmatpush1.msra.mxu0 0.0
    %792 = vmatprep.subr.mxu0 0.0
    %793 = vmatpush1.msra.mxu0 0.0
    %794 = vmatprep.subr.mxu0 0.0
    %795 = vmatpush1.msra.mxu0 0.0
    %796 = vmatprep.subr.mxu0 0.0
    %797 = vmatpush1.msra.mxu0 0.0
    %798 = vmatprep.subr.mxu0 0.0
    %799 = vmatpush1.msra.mxu0 0.0
    %800 = vmatprep.subr.mxu0 0.0
    %801 = vmatpush1.msra.mxu0 0.0
    %802 = vmatprep.subr.mxu0 0.0
    %803 = vmatpush1.msra.mxu0 0.0
    %804 = vmatprep.subr.mxu0 0.0
    %805 = vmatpush1.msra.mxu0 0.0
    %806 = vmatprep.subr.mxu0 0.0
    %807 = vmatpush1.msra.mxu0 0.0
    %808 = vmatprep.subr.mxu0 0.0
    %809 = vmatpush1.msra.mxu0 0.0
    %810 = vmatprep.subr.mxu0 0.0
    %811 = vmatpush1.msra.mxu0 0.0
    %812 = vmatprep.subr.mxu0 0.0
    %813 = vmatpush1.msra.mxu0 0.0
    %814 = vmatprep.subr.mxu0 0.0
    %815 = vmatpush1.msra.mxu0 0.0
    %816 = vmatprep.subr.mxu0 0.0
    %817 = vmatpush1.msra.mxu0 0.0
    %818 = vmatprep.subr.mxu0 0.0
    %819 = vmatpush1.msra.mxu0 0.0
    %820 = vmatprep.subr.mxu0 0.0
    %821 = vmatpush1.msra.mxu0 0.0
    %822 = vmatprep.subr.mxu0 0.0
    %823 = vmatpush1.msra.mxu0 0.0
    %824 = vmatprep.subr.mxu0 0.0
    %825 = vmatpush1.msra.mxu0 0.0
    %826 = vmatprep.subr.mxu0 0.0
    %827 = vmatpush1.msra.mxu0 0.0
    %828 = vmatprep.subr.mxu0 0.0
    %829 = vmatpush1.msra.mxu0 0.0
    %830 = vmatprep.subr.mxu0 0.0
    %831 = vmatpush1.msra.mxu0 0.0
    %832 = vmatprep.subr.mxu0 0.0
    %833 = vmatpush1.msra.mxu0 0.0
    %834 = vmatprep.subr.mxu0 0.0
    %835 = vmatpush1.msra.mxu0 0.0
    %836 = vmatprep.subr.mxu0 0.0
    %837 = vmatpush1.msra.mxu0 0.0
    %838 = vmatprep.subr.mxu0 0.0
    %839 = vmatpush1.msra.mxu0 0.0
    %840 = vmatprep.subr.mxu0 0.0
    %841 = vmatpush1.msra.mxu0 0.0
    %842 = vmatprep.subr.mxu0 0.0
    %843 = vmatpush1.msra.mxu0 0.0
    %844 = vmatprep.mubr.f32.mxu0 0.0
    %v845 = vand.u32 %v307, 4294901760
    %846 = vmatmul.mubr.f32.gmra.mrb[0].mxu0 %v845
    %v847 = vpop.f32.mrb[0].mxu0
    %v848 = vadd.f32 %v768, %v847
    %v849 = vpop.f32.mrb[0].mxu0
    %v850 = vadd.f32 %v770, %v849
    %851 = vdwg.mxu0
    %v853 = vsel %vm305, %v185, 0
    %v855 = vand.u32 %v290, 4294901760
    %856 = vmatprep.subr.mxu0 %v855
    %v857 = vand.u32 %v289, 4294901760
    %858 = vmatpush1.msra.mxu0 %v857
    %v859 = vand.u32 %v292, 4294901760
    %860 = vmatprep.subr.mxu0 %v859
    %v861 = vand.u32 %v291, 4294901760
    %862 = vmatpush1.msra.mxu0 %v861
    %v863 = vand.u32 %v294, 4294901760
    %864 = vmatprep.subr.mxu0 %v863
    %v865 = vand.u32 %v293, 4294901760
    %866 = vmatpush1.msra.mxu0 %v865
    %v867 = vand.u32 %v296, 4294901760
    %868 = vmatprep.subr.mxu0 %v867
    %v869 = vand.u32 %v295, 4294901760
    %870 = vmatpush1.msra.mxu0 %v869
    %871 = vmatprep.subr.mxu0 0.0
    %872 = vmatpush1.msra.mxu0 0.0
    %873 = vmatprep.subr.mxu0 0.0
    %874 = vmatpush1.msra.mxu0 0.0
    %875 = vmatprep.subr.mxu0 0.0
    %876 = vmatpush1.msra.mxu0 0.0
    %877 = vmatprep.subr.mxu0 0.0
    %878 = vmatpush1.msra.mxu0 0.0
    %879 = vmatprep.subr.mxu0 0.0
    %880 = vmatpush1.msra.mxu0 0.0
    %881 = vmatprep.subr.mxu0 0.0
    %882 = vmatpush1.msra.mxu0 0.0
    %883 = vmatprep.subr.mxu0 0.0
    %884 = vmatpush1.msra.mxu0 0.0
    %885 = vmatprep.subr.mxu0 0.0
    %886 = vmatpush1.msra.mxu0 0.0
    %887 = vmatprep.subr.mxu0 0.0
    %888 = vmatpush1.msra.mxu0 0.0
    %889 = vmatprep.subr.mxu0 0.0
    %890 = vmatpush1.msra.mxu0 0.0
    %891 = vmatprep.subr.mxu0 0.0
    %892 = vmatpush1.msra.mxu0 0.0
    %893 = vmatprep.subr.mxu0 0.0
    %894 = vmatpush1.msra.mxu0 0.0
    %895 = vmatprep.subr.mxu0 0.0
    %896 = vmatpush1.msra.mxu0 0.0
    %897 = vmatprep.subr.mxu0 0.0
    %898 = vmatpush1.msra.mxu0 0.0
    %899 = vmatprep.subr.mxu0 0.0
    %900 = vmatpush1.msra.mxu0 0.0
    %901 = vmatprep.subr.mxu0 0.0
    %902 = vmatpush1.msra.mxu0 0.0
    %903 = vmatprep.subr.mxu0 0.0
    %904 = vmatpush1.msra.mxu0 0.0
    %905 = vmatprep.subr.mxu0 0.0
    %906 = vmatpush1.msra.mxu0 0.0
    %907 = vmatprep.subr.mxu0 0.0
    %908 = vmatpush1.msra.mxu0 0.0
    %909 = vmatprep.subr.mxu0 0.0
    %910 = vmatpush1.msra.mxu0 0.0
    %911 = vmatprep.subr.mxu0 0.0
    %912 = vmatpush1.msra.mxu0 0.0
    %913 = vmatprep.subr.mxu0 0.0
    %914 = vmatpush1.msra.mxu0 0.0
    %915 = vmatprep.subr.mxu0 0.0
    %916 = vmatpush1.msra.mxu0 0.0
    %917 = vmatprep.subr.mxu0 0.0
    %918 = vmatpush1.msra.mxu0 0.0
    %919 = vmatprep.subr.mxu0 0.0
    %920 = vmatpush1.msra.mxu0 0.0
    %921 = vmatprep.subr.mxu0 0.0
    %922 = vmatpush1.msra.mxu0 0.0
    %923 = vmatprep.subr.mxu0 0.0
    %924 = vmatpush1.msra.mxu0 0.0
    %925 = vmatprep.subr.mxu0 0.0
    %926 = vmatpush1.msra.mxu0 0.0
    %927 = vmatprep.mubr.f32.mxu0 0.0
    %v928 = vand.u32 %v853, 4294901760
    %v929 = vsub.f32 %v853, %v928
    %v930 = vand.u32 %v929, 4294901760
    %v931 = vsub.f32 %v929, %v930
    %v932 = vand.u32 %v931, 4294901760
    %933 = vmatmul.mubr.f32.gmra.mrb[0].mxu0 %v932
    %v934 = vpop.f32.mrb[0].mxu0
    %v935 = vadd.f32 %v848, %v934
    %v936 = vpop.f32.mrb[0].mxu0
    %v937 = vadd.f32 %v850, %v936
    %938 = vdwg.mxu0
    %v939 = vand.u32 %v290, 4294901760
    %v940 = vsub.f32 %v290, %v939
    %v941 = vand.u32 %v940, 4294901760
    %v942 = vsub.f32 %v940, %v941
    %v943 = vand.u32 %v942, 4294901760
    %944 = vmatprep.subr.mxu0 %v943
    %v945 = vand.u32 %v289, 4294901760
    %v946 = vsub.f32 %v289, %v945
    %v947 = vand.u32 %v946, 4294901760
    %v948 = vsub.f32 %v946, %v947
    %v949 = vand.u32 %v948, 4294901760
    %950 = vmatpush1.msra.mxu0 %v949
    %v951 = vand.u32 %v292, 4294901760
    %v952 = vsub.f32 %v292, %v951
    %v953 = vand.u32 %v952, 4294901760
    %v954 = vsub.f32 %v952, %v953
    %v955 = vand.u32 %v954, 4294901760
    %956 = vmatprep.subr.mxu0 %v955
    %v957 = vand.u32 %v291, 4294901760
    %v958 = vsub.f32 %v291, %v957
    %v959 = vand.u32 %v958, 4294901760
    %v960 = vsub.f32 %v958, %v959
    %v961 = vand.u32 %v960, 4294901760
    %962 = vmatpush1.msra.mxu0 %v961
    %v963 = vand.u32 %v294, 4294901760
    %v964 = vsub.f32 %v294, %v963
    %v965 = vand.u32 %v964, 4294901760
    %v966 = vsub.f32 %v964, %v965
    %v967 = vand.u32 %v966, 4294901760
    %968 = vmatprep.subr.mxu0 %v967
    %v969 = vand.u32 %v293, 4294901760
    %v970 = vsub.f32 %v293, %v969
    %v971 = vand.u32 %v970, 4294901760
    %v972 = vsub.f32 %v970, %v971
    %v973 = vand.u32 %v972, 4294901760
    %974 = vmatpush1.msra.mxu0 %v973
    %v975 = vand.u32 %v296, 4294901760
    %v976 = vsub.f32 %v296, %v975
    %v977 = vand.u32 %v976, 4294901760
    %v978 = vsub.f32 %v976, %v977
    %v979 = vand.u32 %v978, 4294901760
    %980 = vmatprep.subr.mxu0 %v979
    %v981 = vand.u32 %v295, 4294901760
    %v982 = vsub.f32 %v295, %v981
    %v983 = vand.u32 %v982, 4294901760
    %v984 = vsub.f32 %v982, %v983
    %v985 = vand.u32 %v984, 4294901760
    %986 = vmatpush1.msra.mxu0 %v985
    %987 = vmatprep.subr.mxu0 0.0
    %988 = vmatpush1.msra.mxu0 0.0
    %989 = vmatprep.subr.mxu0 0.0
    %990 = vmatpush1.msra.mxu0 0.0
    %991 = vmatprep.subr.mxu0 0.0
    %992 = vmatpush1.msra.mxu0 0.0
    %993 = vmatprep.subr.mxu0 0.0
    %994 = vmatpush1.msra.mxu0 0.0
    %995 = vmatprep.subr.mxu0 0.0
    %996 = vmatpush1.msra.mxu0 0.0
    %997 = vmatprep.subr.mxu0 0.0
    %998 = vmatpush1.msra.mxu0 0.0
    %999 = vmatprep.subr.mxu0 0.0
    %1000 = vmatpush1.msra.mxu0 0.0
    %1001 = vmatprep.subr.mxu0 0.0
    %1002 = vmatpush1.msra.mxu0 0.0
    %1003 = vmatprep.subr.mxu0 0.0
    %1004 = vmatpush1.msra.mxu0 0.0
    %1005 = vmatprep.subr.mxu0 0.0
    %1006 = vmatpush1.msra.mxu0 0.0
    %1007 = vmatprep.subr.mxu0 0.0
    %1008 = vmatpush1.msra.mxu0 0.0
    %1009 = vmatprep.subr.mxu0 0.0
    %1010 = vmatpush1.msra.mxu0 0.0
    %1011 = vmatprep.subr.mxu0 0.0
    %1012 = vmatpush1.msra.mxu0 0.0
    %1013 = vmatprep.subr.mxu0 0.0
    %1014 = vmatpush1.msra.mxu0 0.0
    %1015 = vmatprep.subr.mxu0 0.0
    %1016 = vmatpush1.msra.mxu0 0.0
    %1017 = vmatprep.subr.mxu0 0.0
    %1018 = vmatpush1.msra.mxu0 0.0
    %1019 = vmatprep.subr.mxu0 0.0
    %1020 = vmatpush1.msra.mxu0 0.0
    %1021 = vmatprep.subr.mxu0 0.0
    %1022 = vmatpush1.msra.mxu0 0.0
    %1023 = vmatprep.subr.mxu0 0.0
    %1024 = vmatpush1.msra.mxu0 0.0
    %1025 = vmatprep.subr.mxu0 0.0
    %1026 = vmatpush1.msra.mxu0 0.0
    %1027 = vmatprep.subr.mxu0 0.0
    %1028 = vmatpush1.msra.mxu0 0.0
    %1029 = vmatprep.subr.mxu0 0.0
    %1030 = vmatpush1.msra.mxu0 0.0
    %1031 = vmatprep.subr.mxu0 0.0
    %1032 = vmatpush1.msra.mxu0 0.0
    %1033 = vmatprep.subr.mxu0 0.0
    %1034 = vmatpush1.msra.mxu0 0.0
    %1035 = vmatprep.subr.mxu0 0.0
    %1036 = vmatpush1.msra.mxu0 0.0
    %1037 = vmatprep.subr.mxu0 0.0
    %1038 = vmatpush1.msra.mxu0 0.0
    %1039 = vmatprep.subr.mxu0 0.0
    %1040 = vmatpush1.msra.mxu0 0.0
    %1041 = vmatprep.subr.mxu0 0.0
    %1042 = vmatpush1.msra.mxu0 0.0
    %1043 = vmatprep.mubr.f32.mxu0 0.0
    %v1044 = vand.u32 %v853, 4294901760
    %1045 = vmatmul.mubr.f32.gmra.mrb[0].mxu0 %v1044
    %v1046 = vpop.f32.mrb[0].mxu0
    %v1047 = vadd.f32 %v935, %v1046
    %v1048 = vpop.f32.mrb[0].mxu0
    %v1049 = vadd.f32 %v937, %v1048
    %1050 = vdwg.mxu0
    %v1051 = vand.u32 %v290, 4294901760
    %v1052 = vsub.f32 %v290, %v1051
    %1053 = vmatprep.subr.mxu0 %v1052
    %v1054 = vand.u32 %v289, 4294901760
    %v1055 = vsub.f32 %v289, %v1054
    %1056 = vmatpush1.msra.mxu0 %v1055
    %v1057 = vand.u32 %v292, 4294901760
    %v1058 = vsub.f32 %v292, %v1057
    %1059 = vmatprep.subr.mxu0 %v1058
    %v1060 = vand.u32 %v291, 4294901760
    %v1061 = vsub.f32 %v291, %v1060
    %1062 = vmatpush1.msra.mxu0 %v1061
    %v1063 = vand.u32 %v294, 4294901760
    %v1064 = vsub.f32 %v294, %v1063
    %1065 = vmatprep.subr.mxu0 %v1064
    %v1066 = vand.u32 %v293, 4294901760
    %v1067 = vsub.f32 %v293, %v1066
    %1068 = vmatpush1.msra.mxu0 %v1067
    %v1069 = vand.u32 %v296, 4294901760
    %v1070 = vsub.f32 %v296, %v1069
    %1071 = vmatprep.subr.mxu0 %v1070
    %v1072 = vand.u32 %v295, 4294901760
    %v1073 = vsub.f32 %v295, %v1072
    %1074 = vmatpush1.msra.mxu0 %v1073
    %1075 = vmatprep.subr.mxu0 0.0
    %1076 = vmatpush1.msra.mxu0 0.0
    %1077 = vmatprep.subr.mxu0 0.0
    %1078 = vmatpush1.msra.mxu0 0.0
    %1079 = vmatprep.subr.mxu0 0.0
    %1080 = vmatpush1.msra.mxu0 0.0
    %1081 = vmatprep.subr.mxu0 0.0
    %1082 = vmatpush1.msra.mxu0 0.0
    %1083 = vmatprep.subr.mxu0 0.0
    %1084 = vmatpush1.msra.mxu0 0.0
    %1085 = vmatprep.subr.mxu0 0.0
    %1086 = vmatpush1.msra.mxu0 0.0
    %1087 = vmatprep.subr.mxu0 0.0
    %1088 = vmatpush1.msra.mxu0 0.0
    %1089 = vmatprep.subr.mxu0 0.0
    %1090 = vmatpush1.msra.mxu0 0.0
    %1091 = vmatprep.subr.mxu0 0.0
    %1092 = vmatpush1.msra.mxu0 0.0
    %1093 = vmatprep.subr.mxu0 0.0
    %1094 = vmatpush1.msra.mxu0 0.0
    %1095 = vmatprep.subr.mxu0 0.0
    %1096 = vmatpush1.msra.mxu0 0.0
    %1097 = vmatprep.subr.mxu0 0.0
    %1098 = vmatpush1.msra.mxu0 0.0
    %1099 = vmatprep.subr.mxu0 0.0
    %1100 = vmatpush1.msra.mxu0 0.0
    %1101 = vmatprep.subr.mxu0 0.0
    %1102 = vmatpush1.msra.mxu0 0.0
    %1103 = vmatprep.subr.mxu0 0.0
    %1104 = vmatpush1.msra.mxu0 0.0
    %1105 = vmatprep.subr.mxu0 0.0
    %1106 = vmatpush1.msra.mxu0 0.0
    %1107 = vmatprep.subr.mxu0 0.0
    %1108 = vmatpush1.msra.mxu0 0.0
    %1109 = vmatprep.subr.mxu0 0.0
    %1110 = vmatpush1.msra.mxu0 0.0
    %1111 = vmatprep.subr.mxu0 0.0
    %1112 = vmatpush1.msra.mxu0 0.0
    %1113 = vmatprep.subr.mxu0 0.0
    %1114 = vmatpush1.msra.mxu0 0.0
    %1115 = vmatprep.subr.mxu0 0.0
    %1116 = vmatpush1.msra.mxu0 0.0
    %1117 = vmatprep.subr.mxu0 0.0
    %1118 = vmatpush1.msra.mxu0 0.0
    %1119 = vmatprep.subr.mxu0 0.0
    %1120 = vmatpush1.msra.mxu0 0.0
    %1121 = vmatprep.subr.mxu0 0.0
    %1122 = vmatpush1.msra.mxu0 0.0
    %1123 = vmatprep.subr.mxu0 0.0
    %1124 = vmatpush1.msra.mxu0 0.0
    %1125 = vmatprep.subr.mxu0 0.0
    %1126 = vmatpush1.msra.mxu0 0.0
    %1127 = vmatprep.subr.mxu0 0.0
    %1128 = vmatpush1.msra.mxu0 0.0
    %1129 = vmatprep.subr.mxu0 0.0
    %1130 = vmatpush1.msra.mxu0 0.0
    %1131 = vmatprep.mubr.f32.mxu0 0.0
    %v1132 = vand.u32 %v853, 4294901760
    %v1133 = vsub.f32 %v853, %v1132
    %1134 = vmatmul.mubr.f32.gmra.mrb[0].mxu0 %v1133
    %v1135 = vpop.f32.mrb[0].mxu0
    %v1136 = vadd.f32 %v1047, %v1135
    %v1137 = vpop.f32.mrb[0].mxu0
    %v1138 = vadd.f32 %v1049, %v1137
    %1139 = vdwg.mxu0
    %v1140 = vand.u32 %v290, 4294901760
    %1141 = vmatprep.subr.mxu0 %v1140
    %v1142 = vand.u32 %v289, 4294901760
    %1143 = vmatpush1.msra.mxu0 %v1142
    %v1144 = vand.u32 %v292, 4294901760
    %1145 = vmatprep.subr.mxu0 %v1144
    %v1146 = vand.u32 %v291, 4294901760
    %1147 = vmatpush1.msra.mxu0 %v1146
    %v1148 = vand.u32 %v294, 4294901760
    %1149 = vmatprep.subr.mxu0 %v1148
    %v1150 = vand.u32 %v293, 4294901760
    %1151 = vmatpush1.msra.mxu0 %v1150
    %v1152 = vand.u32 %v296, 4294901760
    %1153 = vmatprep.subr.mxu0 %v1152
    %v1154 = vand.u32 %v295, 4294901760
    %1155 = vmatpush1.msra.mxu0 %v1154
    %1156 = vmatprep.subr.mxu0 0.0
    %1157 = vmatpush1.msra.mxu0 0.0
    %1158 = vmatprep.subr.mxu0 0.0
    %1159 = vmatpush1.msra.mxu0 0.0
    %1160 = vmatprep.subr.mxu0 0.0
    %1161 = vmatpush1.msra.mxu0 0.0
    %1162 = vmatprep.subr.mxu0 0.0
    %1163 = vmatpush1.msra.mxu0 0.0
    %1164 = vmatprep.subr.mxu0 0.0
    %1165 = vmatpush1.msra.mxu0 0.0
    %1166 = vmatprep.subr.mxu0 0.0
    %1167 = vmatpush1.msra.mxu0 0.0
    %1168 = vmatprep.subr.mxu0 0.0
    %1169 = vmatpush1.msra.mxu0 0.0
    %1170 = vmatprep.subr.mxu0 0.0
    %1171 = vmatpush1.msra.mxu0 0.0
    %1172 = vmatprep.subr.mxu0 0.0
    %1173 = vmatpush1.msra.mxu0 0.0
    %1174 = vmatprep.subr.mxu0 0.0
    %1175 = vmatpush1.msra.mxu0 0.0
    %1176 = vmatprep.subr.mxu0 0.0
    %1177 = vmatpush1.msra.mxu0 0.0
    %1178 = vmatprep.subr.mxu0 0.0
    %1179 = vmatpush1.msra.mxu0 0.0
    %1180 = vmatprep.subr.mxu0 0.0
    %1181 = vmatpush1.msra.mxu0 0.0
    %1182 = vmatprep.subr.mxu0 0.0
    %1183 = vmatpush1.msra.mxu0 0.0
    %1184 = vmatprep.subr.mxu0 0.0
    %1185 = vmatpush1.msra.mxu0 0.0
    %1186 = vmatprep.subr.mxu0 0.0
    %1187 = vmatpush1.msra.mxu0 0.0
    %1188 = vmatprep.subr.mxu0 0.0
    %1189 = vmatpush1.msra.mxu0 0.0
    %1190 = vmatprep.subr.mxu0 0.0
    %1191 = vmatpush1.msra.mxu0 0.0
    %1192 = vmatprep.subr.mxu0 0.0
    %1193 = vmatpush1.msra.mxu0 0.0
    %1194 = vmatprep.subr.mxu0 0.0
    %1195 = vmatpush1.msra.mxu0 0.0
    %1196 = vmatprep.subr.mxu0 0.0
    %1197 = vmatpush1.msra.mxu0 0.0
    %1198 = vmatprep.subr.mxu0 0.0
    %1199 = vmatpush1.msra.mxu0 0.0
    %1200 = vmatprep.subr.mxu0 0.0
    %1201 = vmatpush1.msra.mxu0 0.0
    %1202 = vmatprep.subr.mxu0 0.0
    %1203 = vmatpush1.msra.mxu0 0.0
    %1204 = vmatprep.subr.mxu0 0.0
    %1205 = vmatpush1.msra.mxu0 0.0
    %1206 = vmatprep.subr.mxu0 0.0
    %1207 = vmatpush1.msra.mxu0 0.0
    %1208 = vmatprep.subr.mxu0 0.0
    %1209 = vmatpush1.msra.mxu0 0.0
    %1210 = vmatprep.subr.mxu0 0.0
    %1211 = vmatpush1.msra.mxu0 0.0
    %1212 = vmatprep.mubr.f32.mxu0 0.0
    %v1213 = vand.u32 %v853, 4294901760
    %v1214 = vsub.f32 %v853, %v1213
    %v1215 = vand.u32 %v1214, 4294901760
    %1216 = vmatmul.mubr.f32.gmra.mrb[0].mxu0 %v1215
    %v1217 = vpop.f32.mrb[0].mxu0
    %v1218 = vadd.f32 %v1136, %v1217
    %v1219 = vpop.f32.mrb[0].mxu0
    %v1220 = vadd.f32 %v1138, %v1219
    %1221 = vdwg.mxu0
    %v1222 = vand.u32 %v290, 4294901760
    %v1223 = vsub.f32 %v290, %v1222
    %v1224 = vand.u32 %v1223, 4294901760
    %1225 = vmatprep.subr.mxu0 %v1224
    %v1226 = vand.u32 %v289, 4294901760
    %v1227 = vsub.f32 %v289, %v1226
    %v1228 = vand.u32 %v1227, 4294901760
    %1229 = vmatpush1.msra.mxu0 %v1228
    %v1230 = vand.u32 %v292, 4294901760
    %v1231 = vsub.f32 %v292, %v1230
    %v1232 = vand.u32 %v1231, 4294901760
    %1233 = vmatprep.subr.mxu0 %v1232
    %v1234 = vand.u32 %v291, 4294901760
    %v1235 = vsub.f32 %v291, %v1234
    %v1236 = vand.u32 %v1235, 4294901760
    %1237 = vmatpush1.msra.mxu0 %v1236
    %v1238 = vand.u32 %v294, 4294901760
    %v1239 = vsub.f32 %v294, %v1238
    %v1240 = vand.u32 %v1239, 4294901760
    %1241 = vmatprep.subr.mxu0 %v1240
    %v1242 = vand.u32 %v293, 4294901760
    %v1243 = vsub.f32 %v293, %v1242
    %v1244 = vand.u32 %v1243, 4294901760
    %1245 = vmatpush1.msra.mxu0 %v1244
    %v1246 = vand.u32 %v296, 4294901760
    %v1247 = vsub.f32 %v296, %v1246
    %v1248 = vand.u32 %v1247, 4294901760
    %1249 = vmatprep.subr.mxu0 %v1248
    %v1250 = vand.u32 %v295, 4294901760
    %v1251 = vsub.f32 %v295, %v1250
    %v1252 = vand.u32 %v1251, 4294901760
    %1253 = vmatpush1.msra.mxu0 %v1252
    %1254 = vmatprep.subr.mxu0 0.0
    %1255 = vmatpush1.msra.mxu0 0.0
    %1256 = vmatprep.subr.mxu0 0.0
    %1257 = vmatpush1.msra.mxu0 0.0
    %1258 = vmatprep.subr.mxu0 0.0
    %1259 = vmatpush1.msra.mxu0 0.0
    %1260 = vmatprep.subr.mxu0 0.0
    %1261 = vmatpush1.msra.mxu0 0.0
    %1262 = vmatprep.subr.mxu0 0.0
    %1263 = vmatpush1.msra.mxu0 0.0
    %1264 = vmatprep.subr.mxu0 0.0
    %1265 = vmatpush1.msra.mxu0 0.0
    %1266 = vmatprep.subr.mxu0 0.0
    %1267 = vmatpush1.msra.mxu0 0.0
    %1268 = vmatprep.subr.mxu0 0.0
    %1269 = vmatpush1.msra.mxu0 0.0
    %1270 = vmatprep.subr.mxu0 0.0
    %1271 = vmatpush1.msra.mxu0 0.0
    %1272 = vmatprep.subr.mxu0 0.0
    %1273 = vmatpush1.msra.mxu0 0.0
    %1274 = vmatprep.subr.mxu0 0.0
    %1275 = vmatpush1.msra.mxu0 0.0
    %1276 = vmatprep.subr.mxu0 0.0
    %1277 = vmatpush1.msra.mxu0 0.0
    %1278 = vmatprep.subr.mxu0 0.0
    %1279 = vmatpush1.msra.mxu0 0.0
    %1280 = vmatprep.subr.mxu0 0.0
    %1281 = vmatpush1.msra.mxu0 0.0
    %1282 = vmatprep.subr.mxu0 0.0
    %1283 = vmatpush1.msra.mxu0 0.0
    %1284 = vmatprep.subr.mxu0 0.0
    %1285 = vmatpush1.msra.mxu0 0.0
    %1286 = vmatprep.subr.mxu0 0.0
    %1287 = vmatpush1.msra.mxu0 0.0
    %1288 = vmatprep.subr.mxu0 0.0
    %1289 = vmatpush1.msra.mxu0 0.0
    %1290 = vmatprep.subr.mxu0 0.0
    %1291 = vmatpush1.msra.mxu0 0.0
    %1292 = vmatprep.subr.mxu0 0.0
    %1293 = vmatpush1.msra.mxu0 0.0
    %1294 = vmatprep.subr.mxu0 0.0
    %1295 = vmatpush1.msra.mxu0 0.0
    %1296 = vmatprep.subr.mxu0 0.0
    %1297 = vmatpush1.msra.mxu0 0.0
    %1298 = vmatprep.subr.mxu0 0.0
    %1299 = vmatpush1.msra.mxu0 0.0
    %1300 = vmatprep.subr.mxu0 0.0
    %1301 = vmatpush1.msra.mxu0 0.0
    %1302 = vmatprep.subr.mxu0 0.0
    %1303 = vmatpush1.msra.mxu0 0.0
    %1304 = vmatprep.subr.mxu0 0.0
    %1305 = vmatpush1.msra.mxu0 0.0
    %1306 = vmatprep.subr.mxu0 0.0
    %1307 = vmatpush1.msra.mxu0 0.0
    %1308 = vmatprep.subr.mxu0 0.0
    %1309 = vmatpush1.msra.mxu0 0.0
    %1310 = vmatprep.mubr.f32.mxu0 0.0
    %v1311 = vand.u32 %v853, 4294901760
    %1312 = vmatmul.mubr.f32.gmra.mrb[0].mxu0 %v1311
    %v1313 = vpop.f32.mrb[0].mxu0
    %v1314 = vadd.f32 %v1218, %v1313
    %v1315 = vpop.f32.mrb[0].mxu0
    %v1316 = vadd.f32 %v1220, %v1315
    %1317 = vdwg.mxu0
    %v1318 = vand.u32 %v290, 4294901760
    %1319 = vmatprep.subr.mxu0 %v1318
    %v1320 = vand.u32 %v289, 4294901760
    %1321 = vmatpush1.msra.mxu0 %v1320
    %v1322 = vand.u32 %v292, 4294901760
    %1323 = vmatprep.subr.mxu0 %v1322
    %v1324 = vand.u32 %v291, 4294901760
    %1325 = vmatpush1.msra.mxu0 %v1324
    %v1326 = vand.u32 %v294, 4294901760
    %1327 = vmatprep.subr.mxu0 %v1326
    %v1328 = vand.u32 %v293, 4294901760
    %1329 = vmatpush1.msra.mxu0 %v1328
    %v1330 = vand.u32 %v296, 4294901760
    %1331 = vmatprep.subr.mxu0 %v1330
    %v1332 = vand.u32 %v295, 4294901760
    %1333 = vmatpush1.msra.mxu0 %v1332
    %1334 = vmatprep.subr.mxu0 0.0
    %1335 = vmatpush1.msra.mxu0 0.0
    %1336 = vmatprep.subr.mxu0 0.0
    %1337 = vmatpush1.msra.mxu0 0.0
    %1338 = vmatprep.subr.mxu0 0.0
    %1339 = vmatpush1.msra.mxu0 0.0
    %1340 = vmatprep.subr.mxu0 0.0
    %1341 = vmatpush1.msra.mxu0 0.0
    %1342 = vmatprep.subr.mxu0 0.0
    %1343 = vmatpush1.msra.mxu0 0.0
    %1344 = vmatprep.subr.mxu0 0.0
    %1345 = vmatpush1.msra.mxu0 0.0
    %1346 = vmatprep.subr.mxu0 0.0
    %1347 = vmatpush1.msra.mxu0 0.0
    %1348 = vmatprep.subr.mxu0 0.0
    %1349 = vmatpush1.msra.mxu0 0.0
    %1350 = vmatprep.subr.mxu0 0.0
    %1351 = vmatpush1.msra.mxu0 0.0
    %1352 = vmatprep.subr.mxu0 0.0
    %1353 = vmatpush1.msra.mxu0 0.0
    %1354 = vmatprep.subr.mxu0 0.0
    %1355 = vmatpush1.msra.mxu0 0.0
    %1356 = vmatprep.subr.mxu0 0.0
    %1357 = vmatpush1.msra.mxu0 0.0
    %1358 = vmatprep.subr.mxu0 0.0
    %1359 = vmatpush1.msra.mxu0 0.0
    %1360 = vmatprep.subr.mxu0 0.0
    %1361 = vmatpush1.msra.mxu0 0.0
    %1362 = vmatprep.subr.mxu0 0.0
    %1363 = vmatpush1.msra.mxu0 0.0
    %1364 = vmatprep.subr.mxu0 0.0
    %1365 = vmatpush1.msra.mxu0 0.0
    %1366 = vmatprep.subr.mxu0 0.0
    %1367 = vmatpush1.msra.mxu0 0.0
    %1368 = vmatprep.subr.mxu0 0.0
    %1369 = vmatpush1.msra.mxu0 0.0
    %1370 = vmatprep.subr.mxu0 0.0
    %1371 = vmatpush1.msra.mxu0 0.0
    %1372 = vmatprep.subr.mxu0 0.0
    %1373 = vmatpush1.msra.mxu0 0.0
    %1374 = vmatprep.subr.mxu0 0.0
    %1375 = vmatpush1.msra.mxu0 0.0
    %1376 = vmatprep.subr.mxu0 0.0
    %1377 = vmatpush1.msra.mxu0 0.0
    %1378 = vmatprep.subr.mxu0 0.0
    %1379 = vmatpush1.msra.mxu0 0.0
    %1380 = vmatprep.subr.mxu0 0.0
    %1381 = vmatpush1.msra.mxu0 0.0
    %1382 = vmatprep.subr.mxu0 0.0
    %1383 = vmatpush1.msra.mxu0 0.0
    %1384 = vmatprep.subr.mxu0 0.0
    %1385 = vmatpush1.msra.mxu0 0.0
    %1386 = vmatprep.subr.mxu0 0.0
    %1387 = vmatpush1.msra.mxu0 0.0
    %1388 = vmatprep.subr.mxu0 0.0
    %1389 = vmatpush1.msra.mxu0 0.0
    %1390 = vmatprep.mubr.f32.mxu0 0.0
    %v1391 = vand.u32 %v853, 4294901760
    %1392 = vmatmul.mubr.f32.gmra.mrb[0].mxu0 %v1391
    %v1393 = vpop.f32.mrb[0].mxu0
    %v1394 = vadd.f32 %v1314, %v1393
    %v1395 = vpop.f32.mrb[0].mxu0
    %v1396 = vadd.f32 %v1316, %v1395
    %1397 = vdwg.mxu0
    %v1398 = vld [vmem:[%s4] sm:$0x3]
    %v1400 = vlaneseq
    %v1401 = vshrl.u32 %v1400, 7
    %v1402 = vsub.s32 0, %v1401
    %v1403 = vrot.slane %v1398, %v1402
    %v1404 = vlaneseq
    %v1405 = vshrl.u32 %v1404, 7
    %v1406 = vsub.s32 1, %v1405
    %v1407 = vrot.slane %v1398, %v1406
    %v1410 = vadd.f32 %v1394, %v1403
    %v1411 = vadd.f32 %v1396, %v1407
    %v1412 = vsub.f32 0.0, %v1410
    %v1413 = vsub.f32 0.0, %v1411
    %v1414 = vmul.f32 %v1412, 1.442695
    %v1415 = vpow.pop %v1414
    %v1416 = vmul.f32 %v1413, 1.442695
    %v1417 = vpow.pop %v1416
    %v1418 = vadd.f32 %v1415, 1.0
    %v1419 = vadd.f32 %v1417, 1.0
    %v1420 = vrcp.pop %v1418
    %v1421 = vmul.f32 1.0, %v1420
    %v1422 = vrcp.pop %v1419
    %v1423 = vmul.f32 1.0, %v1422
    %v1424 = vmul.f32 %v1410, %v1421
    %v1425 = vmul.f32 %v1411, %v1423
    %v1426 = vld [vmem:[#allocation7] sm:$0xff]
    %v1427 = vld [vmem:[#allocation7 + $0x8] sm:$0xff]
    %v1428 = vld [vmem:[#allocation7 + $0x10] sm:$0xff]
    %v1429 = vld [vmem:[#allocation7 + $0x18] sm:$0xff]
    %v1430 = vld [vmem:[#allocation7 + $0x20] sm:$0xff]
    %v1431 = vld [vmem:[#allocation7 + $0x28] sm:$0xff]
    %v1432 = vld [vmem:[#allocation7 + $0x30] sm:$0xff]
    %v1433 = vld [vmem:[#allocation7 + $0x38] sm:$0xff]
    %v1434 = vld [vmem:[#allocation7 + $0x40] sm:$0xff]
    %v1435 = vld [vmem:[#allocation7 + $0x48] sm:$0xff]
    %v1436 = vld [vmem:[#allocation7 + $0x50] sm:$0xff]
    %v1437 = vld [vmem:[#allocation7 + $0x58] sm:$0xff]
    %v1438 = vld [vmem:[#allocation7 + $0x60] sm:$0xff]
    %v1439 = vld [vmem:[#allocation7 + $0x68] sm:$0xff]
    %v1440 = vld [vmem:[#allocation7 + $0x70] sm:$0xff]
    %v1441 = vld [vmem:[#allocation7 + $0x78] sm:$0xff]
    %v1442 = vld [vmem:[#allocation7 + $0x80] sm:$0xff]
    %v1443 = vld [vmem:[#allocation7 + $0x88] sm:$0xff]
    %v1444 = vld [vmem:[#allocation7 + $0x90] sm:$0xff]
    %v1445 = vld [vmem:[#allocation7 + $0x98] sm:$0xff]
    %v1446 = vld [vmem:[#allocation7 + $0xa0] sm:$0xff]
    %v1447 = vld [vmem:[#allocation7 + $0xa8] sm:$0xff]
    %v1448 = vld [vmem:[#allocation7 + $0xb0] sm:$0xff]
    %v1449 = vld [vmem:[#allocation7 + $0xb8] sm:$0xff]
    %v1450 = vld [vmem:[#allocation7 + $0xc0] sm:$0xff]
    %v1451 = vld [vmem:[#allocation7 + $0xc8] sm:$0xff]
    %v1452 = vld [vmem:[#allocation7 + $0xd0] sm:$0xff]
    %v1453 = vld [vmem:[#allocation7 + $0xd8] sm:$0xff]
    %v1454 = vld [vmem:[#allocation7 + $0xe0] sm:$0xff]
    %v1455 = vld [vmem:[#allocation7 + $0xe8] sm:$0xff]
    %v1456 = vld [vmem:[#allocation7 + $0xf0] sm:$0xff]
    %v1457 = vld [vmem:[#allocation7 + $0xf8] sm:$0xff]
    %v1458 = vld [vmem:[#allocation7 + $0x100] sm:$0xff]
    %v1459 = vld [vmem:[#allocation7 + $0x108] sm:$0xff]
    %v1460 = vld [vmem:[#allocation7 + $0x110] sm:$0xff]
    %v1461 = vld [vmem:[#allocation7 + $0x118] sm:$0xff]
    %v1462 = vld [vmem:[#allocation7 + $0x120] sm:$0xff]
    %v1463 = vld [vmem:[#allocation7 + $0x128] sm:$0xff]
    %v1464 = vld [vmem:[#allocation7 + $0x130] sm:$0xff]
    %v1465 = vld [vmem:[#allocation7 + $0x138] sm:$0xff]
    %v1466 = vld [vmem:[#allocation7 + $0x140] sm:$0xff]
    %v1467 = vld [vmem:[#allocation7 + $0x148] sm:$0xff]
    %v1468 = vld [vmem:[#allocation7 + $0x150] sm:$0xff]
    %v1469 = vld [vmem:[#allocation7 + $0x158] sm:$0xff]
    %v1470 = vld [vmem:[#allocation7 + $0x160] sm:$0xff]
    %v1471 = vld [vmem:[#allocation7 + $0x168] sm:$0xff]
    %v1472 = vld [vmem:[#allocation7 + $0x170] sm:$0xff]
    %v1473 = vld [vmem:[#allocation7 + $0x178] sm:$0xff]
    %v1474 = vld [vmem:[#allocation7 + $0x180] sm:$0xff]
    %v1475 = vld [vmem:[#allocation7 + $0x188] sm:$0xff]
    %v1476 = vld [vmem:[#allocation7 + $0x190] sm:$0xff]
    %v1477 = vld [vmem:[#allocation7 + $0x198] sm:$0xff]
    %v1478 = vld [vmem:[#allocation7 + $0x1a0] sm:$0xff]
    %v1479 = vld [vmem:[#allocation7 + $0x1a8] sm:$0xff]
    %v1480 = vld [vmem:[#allocation7 + $0x1b0] sm:$0xff]
    %v1481 = vld [vmem:[#allocation7 + $0x1b8] sm:$0xff]
    %v1482 = vld [vmem:[#allocation7 + $0x1c0] sm:$0xff]
    %v1483 = vld [vmem:[#allocation7 + $0x1c8] sm:$0xff]
    %v1484 = vld [vmem:[#allocation7 + $0x1d0] sm:$0xff]
    %v1485 = vld [vmem:[#allocation7 + $0x1d8] sm:$0xff]
    %v1486 = vld [vmem:[#allocation7 + $0x1e0] sm:$0xff]
    %v1487 = vld [vmem:[#allocation7 + $0x1e8] sm:$0xff]
    %v1488 = vld [vmem:[#allocation7 + $0x1f0] sm:$0xff]
    %v1489 = vld [vmem:[#allocation7 + $0x1f8] sm:$0xff]
    %v1490 = vld [vmem:[%s6] sm:$0x3]
    %v1492 = vlaneseq
    %v1493 = vshrl.u32 %v1492, 7
    %v1494 = vsub.s32 0, %v1493
    %v1495 = vrot.slane %v1490, %v1494
    %v1496 = vlaneseq
    %v1497 = vshrl.u32 %v1496, 7
    %v1498 = vsub.s32 1, %v1497
    %v1499 = vrot.slane %v1490, %v1498
    %v1502 = vand.u32 %v1427, 4294901760
    %1503 = vmatprep.subr.mxu0 %v1502
    %v1504 = vand.u32 %v1426, 4294901760
    %1505 = vmatpush1.msra.mxu0 %v1504
    %v1506 = vand.u32 %v1429, 4294901760
    %1507 = vmatprep.subr.mxu0 %v1506
    %v1508 = vand.u32 %v1428, 4294901760
    %1509 = vmatpush1.msra.mxu0 %v1508
    %v1510 = vand.u32 %v1431, 4294901760
    %1511 = vmatprep.subr.mxu0 %v1510
    %v1512 = vand.u32 %v1430, 4294901760
    %1513 = vmatpush1.msra.mxu0 %v1512
    %v1514 = vand.u32 %v1433, 4294901760
    %1515 = vmatprep.subr.mxu0 %v1514
    %v1516 = vand.u32 %v1432, 4294901760
    %1517 = vmatpush1.msra.mxu0 %v1516
    %v1518 = vand.u32 %v1435, 4294901760
    %1519 = vmatprep.subr.mxu0 %v1518
    %v1520 = vand.u32 %v1434, 4294901760
    %1521 = vmatpush1.msra.mxu0 %v1520
    %v1522 = vand.u32 %v1437, 4294901760
    %1523 = vmatprep.subr.mxu0 %v1522
    %v1524 = vand.u32 %v1436, 4294901760
    %1525 = vmatpush1.msra.mxu0 %v1524
    %v1526 = vand.u32 %v1439, 4294901760
    %1527 = vmatprep.subr.mxu0 %v1526
    %v1528 = vand.u32 %v1438, 4294901760
    %1529 = vmatpush1.msra.mxu0 %v1528
    %v1530 = vand.u32 %v1441, 4294901760
    %1531 = vmatprep.subr.mxu0 %v1530
    %v1532 = vand.u32 %v1440, 4294901760
    %1533 = vmatpush1.msra.mxu0 %v1532
    %v1534 = vand.u32 %v1443, 4294901760
    %1535 = vmatprep.subr.mxu0 %v1534
    %v1536 = vand.u32 %v1442, 4294901760
    %1537 = vmatpush1.msra.mxu0 %v1536
    %v1538 = vand.u32 %v1445, 4294901760
    %1539 = vmatprep.subr.mxu0 %v1538
    %v1540 = vand.u32 %v1444, 4294901760
    %1541 = vmatpush1.msra.mxu0 %v1540
    %v1542 = vand.u32 %v1447, 4294901760
    %1543 = vmatprep.subr.mxu0 %v1542
    %v1544 = vand.u32 %v1446, 4294901760
    %1545 = vmatpush1.msra.mxu0 %v1544
    %v1546 = vand.u32 %v1449, 4294901760
    %1547 = vmatprep.subr.mxu0 %v1546
    %v1548 = vand.u32 %v1448, 4294901760
    %1549 = vmatpush1.msra.mxu0 %v1548
    %v1550 = vand.u32 %v1451, 4294901760
    %1551 = vmatprep.subr.mxu0 %v1550
    %v1552 = vand.u32 %v1450, 4294901760
    %1553 = vmatpush1.msra.mxu0 %v1552
    %v1554 = vand.u32 %v1453, 4294901760
    %1555 = vmatprep.subr.mxu0 %v1554
    %v1556 = vand.u32 %v1452, 4294901760
    %1557 = vmatpush1.msra.mxu0 %v1556
    %v1558 = vand.u32 %v1455, 4294901760
    %1559 = vmatprep.subr.mxu0 %v1558
    %v1560 = vand.u32 %v1454, 4294901760
    %1561 = vmatpush1.msra.mxu0 %v1560
    %v1562 = vand.u32 %v1457, 4294901760
    %1563 = vmatprep.subr.mxu0 %v1562
    %v1564 = vand.u32 %v1456, 4294901760
    %1565 = vmatpush1.msra.mxu0 %v1564
    %v1566 = vand.u32 %v1459, 4294901760
    %1567 = vmatprep.subr.mxu0 %v1566
    %v1568 = vand.u32 %v1458, 4294901760
    %1569 = vmatpush1.msra.mxu0 %v1568
    %v1570 = vand.u32 %v1461, 4294901760
    %1571 = vmatprep.subr.mxu0 %v1570
    %v1572 = vand.u32 %v1460, 4294901760
    %1573 = vmatpush1.msra.mxu0 %v1572
    %v1574 = vand.u32 %v1463, 4294901760
    %1575 = vmatprep.subr.mxu0 %v1574
    %v1576 = vand.u32 %v1462, 4294901760
    %1577 = vmatpush1.msra.mxu0 %v1576
    %v1578 = vand.u32 %v1465, 4294901760
    %1579 = vmatprep.subr.mxu0 %v1578
    %v1580 = vand.u32 %v1464, 4294901760
    %1581 = vmatpush1.msra.mxu0 %v1580
    %v1582 = vand.u32 %v1467, 4294901760
    %1583 = vmatprep.subr.mxu0 %v1582
    %v1584 = vand.u32 %v1466, 4294901760
    %1585 = vmatpush1.msra.mxu0 %v1584
    %v1586 = vand.u32 %v1469, 4294901760
    %1587 = vmatprep.subr.mxu0 %v1586
    %v1588 = vand.u32 %v1468, 4294901760
    %1589 = vmatpush1.msra.mxu0 %v1588
    %v1590 = vand.u32 %v1471, 4294901760
    %1591 = vmatprep.subr.mxu0 %v1590
    %v1592 = vand.u32 %v1470, 4294901760
    %1593 = vmatpush1.msra.mxu0 %v1592
    %v1594 = vand.u32 %v1473, 4294901760
    %1595 = vmatprep.subr.mxu0 %v1594
    %v1596 = vand.u32 %v1472, 4294901760
    %1597 = vmatpush1.msra.mxu0 %v1596
    %v1598 = vand.u32 %v1475, 4294901760
    %1599 = vmatprep.subr.mxu0 %v1598
    %v1600 = vand.u32 %v1474, 4294901760
    %1601 = vmatpush1.msra.mxu0 %v1600
    %v1602 = vand.u32 %v1477, 4294901760
    %1603 = vmatprep.subr.mxu0 %v1602
    %v1604 = vand.u32 %v1476, 4294901760
    %1605 = vmatpush1.msra.mxu0 %v1604
    %v1606 = vand.u32 %v1479, 4294901760
    %1607 = vmatprep.subr.mxu0 %v1606
    %v1608 = vand.u32 %v1478, 4294901760
    %1609 = vmatpush1.msra.mxu0 %v1608
    %v1610 = vand.u32 %v1481, 4294901760
    %1611 = vmatprep.subr.mxu0 %v1610
    %v1612 = vand.u32 %v1480, 4294901760
    %1613 = vmatpush1.msra.mxu0 %v1612
    %v1614 = vand.u32 %v1483, 4294901760
    %1615 = vmatprep.subr.mxu0 %v1614
    %v1616 = vand.u32 %v1482, 4294901760
    %1617 = vmatpush1.msra.mxu0 %v1616
    %v1618 = vand.u32 %v1485, 4294901760
    %1619 = vmatprep.subr.mxu0 %v1618
    %v1620 = vand.u32 %v1484, 4294901760
    %1621 = vmatpush1.msra.mxu0 %v1620
    %v1622 = vand.u32 %v1487, 4294901760
    %1623 = vmatprep.subr.mxu0 %v1622
    %v1624 = vand.u32 %v1486, 4294901760
    %1625 = vmatpush1.msra.mxu0 %v1624
    %v1626 = vand.u32 %v1489, 4294901760
    %1627 = vmatprep.subr.mxu0 %v1626
    %v1628 = vand.u32 %v1488, 4294901760
    %1629 = vmatpush1.msra.mxu0 %v1628
    %v1630 = vand.u32 %v1425, 4294901760
    %v1631 = vsub.f32 %v1425, %v1630
    %v1632 = vand.u32 %v1631, 4294901760
    %v1633 = vsub.f32 %v1631, %v1632
    %v1634 = vand.u32 %v1633, 4294901760
    %1635 = vmatprep.mubr.f32.mxu0 %v1634
    %v1636 = vand.u32 %v1424, 4294901760
    %v1637 = vsub.f32 %v1424, %v1636
    %v1638 = vand.u32 %v1637, 4294901760
    %v1639 = vsub.f32 %v1637, %v1638
    %v1640 = vand.u32 %v1639, 4294901760
    %1641 = vmatmul.mubr.f32.gmra.mrb[0].mxu0 %v1640
    %v1642 = vpop.f32.mrb[0].mxu0
    %v1643 = vadd.f32 %v1495, %v1642
    %v1644 = vpop.f32.mrb[0].mxu0
    %v1645 = vadd.f32 %v1499, %v1644
    %1646 = vdwg.mxu0
    %v1647 = vand.u32 %v1427, 4294901760
    %v1648 = vsub.f32 %v1427, %v1647
    %v1649 = vand.u32 %v1648, 4294901760
    %v1650 = vsub.f32 %v1648, %v1649
    %v1651 = vand.u32 %v1650, 4294901760
    %1652 = vmatprep.subr.mxu0 %v1651
    %v1653 = vand.u32 %v1426, 4294901760
    %v1654 = vsub.f32 %v1426, %v1653
    %v1655 = vand.u32 %v1654, 4294901760
    %v1656 = vsub.f32 %v1654, %v1655
    %v1657 = vand.u32 %v1656, 4294901760
    %1658 = vmatpush1.msra.mxu0 %v1657
    %v1659 = vand.u32 %v1429, 4294901760
    %v1660 = vsub.f32 %v1429, %v1659
    %v1661 = vand.u32 %v1660, 4294901760
    %v1662 = vsub.f32 %v1660, %v1661
    %v1663 = vand.u32 %v1662, 4294901760
    %1664 = vmatprep.subr.mxu0 %v1663
    %v1665 = vand.u32 %v1428, 4294901760
    %v1666 = vsub.f32 %v1428, %v1665
    %v1667 = vand.u32 %v1666, 4294901760
    %v1668 = vsub.f32 %v1666, %v1667
    %v1669 = vand.u32 %v1668, 4294901760
    %1670 = vmatpush1.msra.mxu0 %v1669
    %v1671 = vand.u32 %v1431, 4294901760
    %v1672 = vsub.f32 %v1431, %v1671
    %v1673 = vand.u32 %v1672, 4294901760
    %v1674 = vsub.f32 %v1672, %v1673
    %v1675 = vand.u32 %v1674, 4294901760
    %1676 = vmatprep.subr.mxu0 %v1675
    %v1677 = vand.u32 %v1430, 4294901760
    %v1678 = vsub.f32 %v1430, %v1677
    %v1679 = vand.u32 %v1678, 4294901760
    %v1680 = vsub.f32 %v1678, %v1679
    %v1681 = vand.u32 %v1680, 4294901760
    %1682 = vmatpush1.msra.mxu0 %v1681
    %v1683 = vand.u32 %v1433, 4294901760
    %v1684 = vsub.f32 %v1433, %v1683
    %v1685 = vand.u32 %v1684, 4294901760
    %v1686 = vsub.f32 %v1684, %v1685
    %v1687 = vand.u32 %v1686, 4294901760
    %1688 = vmatprep.subr.mxu0 %v1687
    %v1689 = vand.u32 %v1432, 4294901760
    %v1690 = vsub.f32 %v1432, %v1689
    %v1691 = vand.u32 %v1690, 4294901760
    %v1692 = vsub.f32 %v1690, %v1691
    %v1693 = vand.u32 %v1692, 4294901760
    %1694 = vmatpush1.msra.mxu0 %v1693
    %v1695 = vand.u32 %v1435, 4294901760
    %v1696 = vsub.f32 %v1435, %v1695
    %v1697 = vand.u32 %v1696, 4294901760
    %v1698 = vsub.f32 %v1696, %v1697
    %v1699 = vand.u32 %v1698, 4294901760
    %1700 = vmatprep.subr.mxu0 %v1699
    %v1701 = vand.u32 %v1434, 4294901760
    %v1702 = vsub.f32 %v1434, %v1701
    %v1703 = vand.u32 %v1702, 4294901760
    %v1704 = vsub.f32 %v1702, %v1703
    %v1705 = vand.u32 %v1704, 4294901760
    %1706 = vmatpush1.msra.mxu0 %v1705
    %v1707 = vand.u32 %v1437, 4294901760
    %v1708 = vsub.f32 %v1437, %v1707
    %v1709 = vand.u32 %v1708, 4294901760
    %v1710 = vsub.f32 %v1708, %v1709
    %v1711 = vand.u32 %v1710, 4294901760
    %1712 = vmatprep.subr.mxu0 %v1711
    %v1713 = vand.u32 %v1436, 4294901760
    %v1714 = vsub.f32 %v1436, %v1713
    %v1715 = vand.u32 %v1714, 4294901760
    %v1716 = vsub.f32 %v1714, %v1715
    %v1717 = vand.u32 %v1716, 4294901760
    %1718 = vmatpush1.msra.mxu0 %v1717
    %v1719 = vand.u32 %v1439, 4294901760
    %v1720 = vsub.f32 %v1439, %v1719
    %v1721 = vand.u32 %v1720, 4294901760
    %v1722 = vsub.f32 %v1720, %v1721
    %v1723 = vand.u32 %v1722, 4294901760
    %1724 = vmatprep.subr.mxu0 %v1723
    %v1725 = vand.u32 %v1438, 4294901760
    %v1726 = vsub.f32 %v1438, %v1725
    %v1727 = vand.u32 %v1726, 4294901760
    %v1728 = vsub.f32 %v1726, %v1727
    %v1729 = vand.u32 %v1728, 4294901760
    %1730 = vmatpush1.msra.mxu0 %v1729
    %v1731 = vand.u32 %v1441, 4294901760
    %v1732 = vsub.f32 %v1441, %v1731
    %v1733 = vand.u32 %v1732, 4294901760
    %v1734 = vsub.f32 %v1732, %v1733
    %v1735 = vand.u32 %v1734, 4294901760
    %1736 = vmatprep.subr.mxu0 %v1735
    %v1737 = vand.u32 %v1440, 4294901760
    %v1738 = vsub.f32 %v1440, %v1737
    %v1739 = vand.u32 %v1738, 4294901760
    %v1740 = vsub.f32 %v1738, %v1739
    %v1741 = vand.u32 %v1740, 4294901760
    %1742 = vmatpush1.msra.mxu0 %v1741
    %v1743 = vand.u32 %v1443, 4294901760
    %v1744 = vsub.f32 %v1443, %v1743
    %v1745 = vand.u32 %v1744, 4294901760
    %v1746 = vsub.f32 %v1744, %v1745
    %v1747 = vand.u32 %v1746, 4294901760
    %1748 = vmatprep.subr.mxu0 %v1747
    %v1749 = vand.u32 %v1442, 4294901760
    %v1750 = vsub.f32 %v1442, %v1749
    %v1751 = vand.u32 %v1750, 4294901760
    %v1752 = vsub.f32 %v1750, %v1751
    %v1753 = vand.u32 %v1752, 4294901760
    %1754 = vmatpush1.msra.mxu0 %v1753
    %v1755 = vand.u32 %v1445, 4294901760
    %v1756 = vsub.f32 %v1445, %v1755
    %v1757 = vand.u32 %v1756, 4294901760
    %v1758 = vsub.f32 %v1756, %v1757
    %v1759 = vand.u32 %v1758, 4294901760
    %1760 = vmatprep.subr.mxu0 %v1759
    %v1761 = vand.u32 %v1444, 4294901760
    %v1762 = vsub.f32 %v1444, %v1761
    %v1763 = vand.u32 %v1762, 4294901760
    %v1764 = vsub.f32 %v1762, %v1763
    %v1765 = vand.u32 %v1764, 4294901760
    %1766 = vmatpush1.msra.mxu0 %v1765
    %v1767 = vand.u32 %v1447, 4294901760
    %v1768 = vsub.f32 %v1447, %v1767
    %v1769 = vand.u32 %v1768, 4294901760
    %v1770 = vsub.f32 %v1768, %v1769
    %v1771 = vand.u32 %v1770, 4294901760
    %1772 = vmatprep.subr.mxu0 %v1771
    %v1773 = vand.u32 %v1446, 4294901760
    %v1774 = vsub.f32 %v1446, %v1773
    %v1775 = vand.u32 %v1774, 4294901760
    %v1776 = vsub.f32 %v1774, %v1775
    %v1777 = vand.u32 %v1776, 4294901760
    %1778 = vmatpush1.msra.mxu0 %v1777
    %v1779 = vand.u32 %v1449, 4294901760
    %v1780 = vsub.f32 %v1449, %v1779
    %v1781 = vand.u32 %v1780, 4294901760
    %v1782 = vsub.f32 %v1780, %v1781
    %v1783 = vand.u32 %v1782, 4294901760
    %1784 = vmatprep.subr.mxu0 %v1783
    %v1785 = vand.u32 %v1448, 4294901760
    %v1786 = vsub.f32 %v1448, %v1785
    %v1787 = vand.u32 %v1786, 4294901760
    %v1788 = vsub.f32 %v1786, %v1787
    %v1789 = vand.u32 %v1788, 4294901760
    %1790 = vmatpush1.msra.mxu0 %v1789
    %v1791 = vand.u32 %v1451, 4294901760
    %v1792 = vsub.f32 %v1451, %v1791
    %v1793 = vand.u32 %v1792, 4294901760
    %v1794 = vsub.f32 %v1792, %v1793
    %v1795 = vand.u32 %v1794, 4294901760
    %1796 = vmatprep.subr.mxu0 %v1795
    %v1797 = vand.u32 %v1450, 4294901760
    %v1798 = vsub.f32 %v1450, %v1797
    %v1799 = vand.u32 %v1798, 4294901760
    %v1800 = vsub.f32 %v1798, %v1799
    %v1801 = vand.u32 %v1800, 4294901760
    %1802 = vmatpush1.msra.mxu0 %v1801
    %v1803 = vand.u32 %v1453, 4294901760
    %v1804 = vsub.f32 %v1453, %v1803
    %v1805 = vand.u32 %v1804, 4294901760
    %v1806 = vsub.f32 %v1804, %v1805
    %v1807 = vand.u32 %v1806, 4294901760
    %1808 = vmatprep.subr.mxu0 %v1807
    %v1809 = vand.u32 %v1452, 4294901760
    %v1810 = vsub.f32 %v1452, %v1809
    %v1811 = vand.u32 %v1810, 4294901760
    %v1812 = vsub.f32 %v1810, %v1811
    %v1813 = vand.u32 %v1812, 4294901760
    %1814 = vmatpush1.msra.mxu0 %v1813
    %v1815 = vand.u32 %v1455, 4294901760
    %v1816 = vsub.f32 %v1455, %v1815
    %v1817 = vand.u32 %v1816, 4294901760
    %v1818 = vsub.f32 %v1816, %v1817
    %v1819 = vand.u32 %v1818, 4294901760
    %1820 = vmatprep.subr.mxu0 %v1819
    %v1821 = vand.u32 %v1454, 4294901760
    %v1822 = vsub.f32 %v1454, %v1821
    %v1823 = vand.u32 %v1822, 4294901760
    %v1824 = vsub.f32 %v1822, %v1823
    %v1825 = vand.u32 %v1824, 4294901760
    %1826 = vmatpush1.msra.mxu0 %v1825
    %v1827 = vand.u32 %v1457, 4294901760
    %v1828 = vsub.f32 %v1457, %v1827
    %v1829 = vand.u32 %v1828, 4294901760
    %v1830 = vsub.f32 %v1828, %v1829
    %v1831 = vand.u32 %v1830, 4294901760
    %1832 = vmatprep.subr.mxu0 %v1831
    %v1833 = vand.u32 %v1456, 4294901760
    %v1834 = vsub.f32 %v1456, %v1833
    %v1835 = vand.u32 %v1834, 4294901760
    %v1836 = vsub.f32 %v1834, %v1835
    %v1837 = vand.u32 %v1836, 4294901760
    %1838 = vmatpush1.msra.mxu0 %v1837
    %v1839 = vand.u32 %v1459, 4294901760
    %v1840 = vsub.f32 %v1459, %v1839
    %v1841 = vand.u32 %v1840, 4294901760
    %v1842 = vsub.f32 %v1840, %v1841
    %v1843 = vand.u32 %v1842, 4294901760
    %1844 = vmatprep.subr.mxu0 %v1843
    %v1845 = vand.u32 %v1458, 4294901760
    %v1846 = vsub.f32 %v1458, %v1845
    %v1847 = vand.u32 %v1846, 4294901760
    %v1848 = vsub.f32 %v1846, %v1847
    %v1849 = vand.u32 %v1848, 4294901760
    %1850 = vmatpush1.msra.mxu0 %v1849
    %v1851 = vand.u32 %v1461, 4294901760
    %v1852 = vsub.f32 %v1461, %v1851
    %v1853 = vand.u32 %v1852, 4294901760
    %v1854 = vsub.f32 %v1852, %v1853
    %v1855 = vand.u32 %v1854, 4294901760
    %1856 = vmatprep.subr.mxu0 %v1855
    %v1857 = vand.u32 %v1460, 4294901760
    %v1858 = vsub.f32 %v1460, %v1857
    %v1859 = vand.u32 %v1858, 4294901760
    %v1860 = vsub.f32 %v1858, %v1859
    %v1861 = vand.u32 %v1860, 4294901760
    %1862 = vmatpush1.msra.mxu0 %v1861
    %v1863 = vand.u32 %v1463, 4294901760
    %v1864 = vsub.f32 %v1463, %v1863
    %v1865 = vand.u32 %v1864, 4294901760
    %v1866 = vsub.f32 %v1864, %v1865
    %v1867 = vand.u32 %v1866, 4294901760
    %1868 = vmatprep.subr.mxu0 %v1867
    %v1869 = vand.u32 %v1462, 4294901760
    %v1870 = vsub.f32 %v1462, %v1869
    %v1871 = vand.u32 %v1870, 4294901760
    %v1872 = vsub.f32 %v1870, %v1871
    %v1873 = vand.u32 %v1872, 4294901760
    %1874 = vmatpush1.msra.mxu0 %v1873
    %v1875 = vand.u32 %v1465, 4294901760
    %v1876 = vsub.f32 %v1465, %v1875
    %v1877 = vand.u32 %v1876, 4294901760
    %v1878 = vsub.f32 %v1876, %v1877
    %v1879 = vand.u32 %v1878, 4294901760
    %1880 = vmatprep.subr.mxu0 %v1879
    %v1881 = vand.u32 %v1464, 4294901760
    %v1882 = vsub.f32 %v1464, %v1881
    %v1883 = vand.u32 %v1882, 4294901760
    %v1884 = vsub.f32 %v1882, %v1883
    %v1885 = vand.u32 %v1884, 4294901760
    %1886 = vmatpush1.msra.mxu0 %v1885
    %v1887 = vand.u32 %v1467, 4294901760
    %v1888 = vsub.f32 %v1467, %v1887
    %v1889 = vand.u32 %v1888, 4294901760
    %v1890 = vsub.f32 %v1888, %v1889
    %v1891 = vand.u32 %v1890, 4294901760
    %1892 = vmatprep.subr.mxu0 %v1891
    %v1893 = vand.u32 %v1466, 4294901760
    %v1894 = vsub.f32 %v1466, %v1893
    %v1895 = vand.u32 %v1894, 4294901760
    %v1896 = vsub.f32 %v1894, %v1895
    %v1897 = vand.u32 %v1896, 4294901760
    %1898 = vmatpush1.msra.mxu0 %v1897
    %v1899 = vand.u32 %v1469, 4294901760
    %v1900 = vsub.f32 %v1469, %v1899
    %v1901 = vand.u32 %v1900, 4294901760
    %v1902 = vsub.f32 %v1900, %v1901
    %v1903 = vand.u32 %v1902, 4294901760
    %1904 = vmatprep.subr.mxu0 %v1903
    %v1905 = vand.u32 %v1468, 4294901760
    %v1906 = vsub.f32 %v1468, %v1905
    %v1907 = vand.u32 %v1906, 4294901760
    %v1908 = vsub.f32 %v1906, %v1907
    %v1909 = vand.u32 %v1908, 4294901760
    %1910 = vmatpush1.msra.mxu0 %v1909
    %v1911 = vand.u32 %v1471, 4294901760
    %v1912 = vsub.f32 %v1471, %v1911
    %v1913 = vand.u32 %v1912, 4294901760
    %v1914 = vsub.f32 %v1912, %v1913
    %v1915 = vand.u32 %v1914, 4294901760
    %1916 = vmatprep.subr.mxu0 %v1915
    %v1917 = vand.u32 %v1470, 4294901760
    %v1918 = vsub.f32 %v1470, %v1917
    %v1919 = vand.u32 %v1918, 4294901760
    %v1920 = vsub.f32 %v1918, %v1919
    %v1921 = vand.u32 %v1920, 4294901760
    %1922 = vmatpush1.msra.mxu0 %v1921
    %v1923 = vand.u32 %v1473, 4294901760
    %v1924 = vsub.f32 %v1473, %v1923
    %v1925 = vand.u32 %v1924, 4294901760
    %v1926 = vsub.f32 %v1924, %v1925
    %v1927 = vand.u32 %v1926, 4294901760
    %1928 = vmatprep.subr.mxu0 %v1927
    %v1929 = vand.u32 %v1472, 4294901760
    %v1930 = vsub.f32 %v1472, %v1929
    %v1931 = vand.u32 %v1930, 4294901760
    %v1932 = vsub.f32 %v1930, %v1931
    %v1933 = vand.u32 %v1932, 4294901760
    %1934 = vmatpush1.msra.mxu0 %v1933
    %v1935 = vand.u32 %v1475, 4294901760
    %v1936 = vsub.f32 %v1475, %v1935
    %v1937 = vand.u32 %v1936, 4294901760
    %v1938 = vsub.f32 %v1936, %v1937
    %v1939 = vand.u32 %v1938, 4294901760
    %1940 = vmatprep.subr.mxu0 %v1939
    %v1941 = vand.u32 %v1474, 4294901760
    %v1942 = vsub.f32 %v1474, %v1941
    %v1943 = vand.u32 %v1942, 4294901760
    %v1944 = vsub.f32 %v1942, %v1943
    %v1945 = vand.u32 %v1944, 4294901760
    %1946 = vmatpush1.msra.mxu0 %v1945
    %v1947 = vand.u32 %v1477, 4294901760
    %v1948 = vsub.f32 %v1477, %v1947
    %v1949 = vand.u32 %v1948, 4294901760
    %v1950 = vsub.f32 %v1948, %v1949
    %v1951 = vand.u32 %v1950, 4294901760
    %1952 = vmatprep.subr.mxu0 %v1951
    %v1953 = vand.u32 %v1476, 4294901760
    %v1954 = vsub.f32 %v1476, %v1953
    %v1955 = vand.u32 %v1954, 4294901760
    %v1956 = vsub.f32 %v1954, %v1955
    %v1957 = vand.u32 %v1956, 4294901760
    %1958 = vmatpush1.msra.mxu0 %v1957
    %v1959 = vand.u32 %v1479, 4294901760
    %v1960 = vsub.f32 %v1479, %v1959
    %v1961 = vand.u32 %v1960, 4294901760
    %v1962 = vsub.f32 %v1960, %v1961
    %v1963 = vand.u32 %v1962, 4294901760
    %1964 = vmatprep.subr.mxu0 %v1963
    %v1965 = vand.u32 %v1478, 4294901760
    %v1966 = vsub.f32 %v1478, %v1965
    %v1967 = vand.u32 %v1966, 4294901760
    %v1968 = vsub.f32 %v1966, %v1967
    %v1969 = vand.u32 %v1968, 4294901760
    %1970 = vmatpush1.msra.mxu0 %v1969
    %v1971 = vand.u32 %v1481, 4294901760
    %v1972 = vsub.f32 %v1481, %v1971
    %v1973 = vand.u32 %v1972, 4294901760
    %v1974 = vsub.f32 %v1972, %v1973
    %v1975 = vand.u32 %v1974, 4294901760
    %1976 = vmatprep.subr.mxu0 %v1975
    %v1977 = vand.u32 %v1480, 4294901760
    %v1978 = vsub.f32 %v1480, %v1977
    %v1979 = vand.u32 %v1978, 4294901760
    %v1980 = vsub.f32 %v1978, %v1979
    %v1981 = vand.u32 %v1980, 4294901760
    %1982 = vmatpush1.msra.mxu0 %v1981
    %v1983 = vand.u32 %v1483, 4294901760
    %v1984 = vsub.f32 %v1483, %v1983
    %v1985 = vand.u32 %v1984, 4294901760
    %v1986 = vsub.f32 %v1984, %v1985
    %v1987 = vand.u32 %v1986, 4294901760
    %1988 = vmatprep.subr.mxu0 %v1987
    %v1989 = vand.u32 %v1482, 4294901760
    %v1990 = vsub.f32 %v1482, %v1989
    %v1991 = vand.u32 %v1990, 4294901760
    %v1992 = vsub.f32 %v1990, %v1991
    %v1993 = vand.u32 %v1992, 4294901760
    %1994 = vmatpush1.msra.mxu0 %v1993
    %v1995 = vand.u32 %v1485, 4294901760
    %v1996 = vsub.f32 %v1485, %v1995
    %v1997 = vand.u32 %v1996, 4294901760
    %v1998 = vsub.f32 %v1996, %v1997
    %v1999 = vand.u32 %v1998, 4294901760
    %2000 = vmatprep.subr.mxu0 %v1999
    %v2001 = vand.u32 %v1484, 4294901760
    %v2002 = vsub.f32 %v1484, %v2001
    %v2003 = vand.u32 %v2002, 4294901760
    %v2004 = vsub.f32 %v2002, %v2003
    %v2005 = vand.u32 %v2004, 4294901760
    %2006 = vmatpush1.msra.mxu0 %v2005
    %v2007 = vand.u32 %v1487, 4294901760
    %v2008 = vsub.f32 %v1487, %v2007
    %v2009 = vand.u32 %v2008, 4294901760
    %v2010 = vsub.f32 %v2008, %v2009
    %v2011 = vand.u32 %v2010, 4294901760
    %2012 = vmatprep.subr.mxu0 %v2011
    %v2013 = vand.u32 %v1486, 4294901760
    %v2014 = vsub.f32 %v1486, %v2013
    %v2015 = vand.u32 %v2014, 4294901760
    %v2016 = vsub.f32 %v2014, %v2015
    %v2017 = vand.u32 %v2016, 4294901760
    %2018 = vmatpush1.msra.mxu0 %v2017
    %v2019 = vand.u32 %v1489, 4294901760
    %v2020 = vsub.f32 %v1489, %v2019
    %v2021 = vand.u32 %v2020, 4294901760
    %v2022 = vsub.f32 %v2020, %v2021
    %v2023 = vand.u32 %v2022, 4294901760
    %2024 = vmatprep.subr.mxu0 %v2023
    %v2025 = vand.u32 %v1488, 4294901760
    %v2026 = vsub.f32 %v1488, %v2025
    %v2027 = vand.u32 %v2026, 4294901760
    %v2028 = vsub.f32 %v2026, %v2027
    %v2029 = vand.u32 %v2028, 4294901760
    %2030 = vmatpush1.msra.mxu0 %v2029
    %v2031 = vand.u32 %v1425, 4294901760
    %2032 = vmatprep.mubr.f32.mxu0 %v2031
    %v2033 = vand.u32 %v1424, 4294901760
    %2034 = vmatmul.mubr.f32.gmra.mrb[0].mxu0 %v2033
    %v2035 = vpop.f32.mrb[0].mxu0
    %v2036 = vadd.f32 %v1643, %v2035
    %v2037 = vpop.f32.mrb[0].mxu0
    %v2038 = vadd.f32 %v1645, %v2037
    %2039 = vdwg.mxu0
    %v2040 = vand.u32 %v1427, 4294901760
    %v2041 = vsub.f32 %v1427, %v2040
    %2042 = vmatprep.subr.mxu0 %v2041
    %v2043 = vand.u32 %v1426, 4294901760
    %v2044 = vsub.f32 %v1426, %v2043
    %2045 = vmatpush1.msra.mxu0 %v2044
    %v2046 = vand.u32 %v1429, 4294901760
    %v2047 = vsub.f32 %v1429, %v2046
    %2048 = vmatprep.subr.mxu0 %v2047
    %v2049 = vand.u32 %v1428, 4294901760
    %v2050 = vsub.f32 %v1428, %v2049
    %2051 = vmatpush1.msra.mxu0 %v2050
    %v2052 = vand.u32 %v1431, 4294901760
    %v2053 = vsub.f32 %v1431, %v2052
    %2054 = vmatprep.subr.mxu0 %v2053
    %v2055 = vand.u32 %v1430, 4294901760
    %v2056 = vsub.f32 %v1430, %v2055
    %2057 = vmatpush1.msra.mxu0 %v2056
    %v2058 = vand.u32 %v1433, 4294901760
    %v2059 = vsub.f32 %v1433, %v2058
    %2060 = vmatprep.subr.mxu0 %v2059
    %v2061 = vand.u32 %v1432, 4294901760
    %v2062 = vsub.f32 %v1432, %v2061
    %2063 = vmatpush1.msra.mxu0 %v2062
    %v2064 = vand.u32 %v1435, 4294901760
    %v2065 = vsub.f32 %v1435, %v2064
    %2066 = vmatprep.subr.mxu0 %v2065
    %v2067 = vand.u32 %v1434, 4294901760
    %v2068 = vsub.f32 %v1434, %v2067
    %2069 = vmatpush1.msra.mxu0 %v2068
    %v2070 = vand.u32 %v1437, 4294901760
    %v2071 = vsub.f32 %v1437, %v2070
    %2072 = vmatprep.subr.mxu0 %v2071
    %v2073 = vand.u32 %v1436, 4294901760
    %v2074 = vsub.f32 %v1436, %v2073
    %2075 = vmatpush1.msra.mxu0 %v2074
    %v2076 = vand.u32 %v1439, 4294901760
    %v2077 = vsub.f32 %v1439, %v2076
    %2078 = vmatprep.subr.mxu0 %v2077
    %v2079 = vand.u32 %v1438, 4294901760
    %v2080 = vsub.f32 %v1438, %v2079
    %2081 = vmatpush1.msra.mxu0 %v2080
    %v2082 = vand.u32 %v1441, 4294901760
    %v2083 = vsub.f32 %v1441, %v2082
    %2084 = vmatprep.subr.mxu0 %v2083
    %v2085 = vand.u32 %v1440, 4294901760
    %v2086 = vsub.f32 %v1440, %v2085
    %2087 = vmatpush1.msra.mxu0 %v2086
    %v2088 = vand.u32 %v1443, 4294901760
    %v2089 = vsub.f32 %v1443, %v2088
    %2090 = vmatprep.subr.mxu0 %v2089
    %v2091 = vand.u32 %v1442, 4294901760
    %v2092 = vsub.f32 %v1442, %v2091
    %2093 = vmatpush1.msra.mxu0 %v2092
    %v2094 = vand.u32 %v1445, 4294901760
    %v2095 = vsub.f32 %v1445, %v2094
    %2096 = vmatprep.subr.mxu0 %v2095
    %v2097 = vand.u32 %v1444, 4294901760
    %v2098 = vsub.f32 %v1444, %v2097
    %2099 = vmatpush1.msra.mxu0 %v2098
    %v2100 = vand.u32 %v1447, 4294901760
    %v2101 = vsub.f32 %v1447, %v2100
    %2102 = vmatprep.subr.mxu0 %v2101
    %v2103 = vand.u32 %v1446, 4294901760
    %v2104 = vsub.f32 %v1446, %v2103
    %2105 = vmatpush1.msra.mxu0 %v2104
    %v2106 = vand.u32 %v1449, 4294901760
    %v2107 = vsub.f32 %v1449, %v2106
    %2108 = vmatprep.subr.mxu0 %v2107
    %v2109 = vand.u32 %v1448, 4294901760
    %v2110 = vsub.f32 %v1448, %v2109
    %2111 = vmatpush1.msra.mxu0 %v2110
    %v2112 = vand.u32 %v1451, 4294901760
    %v2113 = vsub.f32 %v1451, %v2112
    %2114 = vmatprep.subr.mxu0 %v2113
    %v2115 = vand.u32 %v1450, 4294901760
    %v2116 = vsub.f32 %v1450, %v2115
    %2117 = vmatpush1.msra.mxu0 %v2116
    %v2118 = vand.u32 %v1453, 4294901760
    %v2119 = vsub.f32 %v1453, %v2118
    %2120 = vmatprep.subr.mxu0 %v2119
    %v2121 = vand.u32 %v1452, 4294901760
    %v2122 = vsub.f32 %v1452, %v2121
    %2123 = vmatpush1.msra.mxu0 %v2122
    %v2124 = vand.u32 %v1455, 4294901760
    %v2125 = vsub.f32 %v1455, %v2124
    %2126 = vmatprep.subr.mxu0 %v2125
    %v2127 = vand.u32 %v1454, 4294901760
    %v2128 = vsub.f32 %v1454, %v2127
    %2129 = vmatpush1.msra.mxu0 %v2128
    %v2130 = vand.u32 %v1457, 4294901760
    %v2131 = vsub.f32 %v1457, %v2130
    %2132 = vmatprep.subr.mxu0 %v2131
    %v2133 = vand.u32 %v1456, 4294901760
    %v2134 = vsub.f32 %v1456, %v2133
    %2135 = vmatpush1.msra.mxu0 %v2134
    %v2136 = vand.u32 %v1459, 4294901760
    %v2137 = vsub.f32 %v1459, %v2136
    %2138 = vmatprep.subr.mxu0 %v2137
    %v2139 = vand.u32 %v1458, 4294901760
    %v2140 = vsub.f32 %v1458, %v2139
    %2141 = vmatpush1.msra.mxu0 %v2140
    %v2142 = vand.u32 %v1461, 4294901760
    %v2143 = vsub.f32 %v1461, %v2142
    %2144 = vmatprep.subr.mxu0 %v2143
    %v2145 = vand.u32 %v1460, 4294901760
    %v2146 = vsub.f32 %v1460, %v2145
    %2147 = vmatpush1.msra.mxu0 %v2146
    %v2148 = vand.u32 %v1463, 4294901760
    %v2149 = vsub.f32 %v1463, %v2148
    %2150 = vmatprep.subr.mxu0 %v2149
    %v2151 = vand.u32 %v1462, 4294901760
    %v2152 = vsub.f32 %v1462, %v2151
    %2153 = vmatpush1.msra.mxu0 %v2152
    %v2154 = vand.u32 %v1465, 4294901760
    %v2155 = vsub.f32 %v1465, %v2154
    %2156 = vmatprep.subr.mxu0 %v2155
    %v2157 = vand.u32 %v1464, 4294901760
    %v2158 = vsub.f32 %v1464, %v2157
    %2159 = vmatpush1.msra.mxu0 %v2158
    %v2160 = vand.u32 %v1467, 4294901760
    %v2161 = vsub.f32 %v1467, %v2160
    %2162 = vmatprep.subr.mxu0 %v2161
    %v2163 = vand.u32 %v1466, 4294901760
    %v2164 = vsub.f32 %v1466, %v2163
    %2165 = vmatpush1.msra.mxu0 %v2164
    %v2166 = vand.u32 %v1469, 4294901760
    %v2167 = vsub.f32 %v1469, %v2166
    %2168 = vmatprep.subr.mxu0 %v2167
    %v2169 = vand.u32 %v1468, 4294901760
    %v2170 = vsub.f32 %v1468, %v2169
    %2171 = vmatpush1.msra.mxu0 %v2170
    %v2172 = vand.u32 %v1471, 4294901760
    %v2173 = vsub.f32 %v1471, %v2172
    %2174 = vmatprep.subr.mxu0 %v2173
    %v2175 = vand.u32 %v1470, 4294901760
    %v2176 = vsub.f32 %v1470, %v2175
    %2177 = vmatpush1.msra.mxu0 %v2176
    %v2178 = vand.u32 %v1473, 4294901760
    %v2179 = vsub.f32 %v1473, %v2178
    %2180 = vmatprep.subr.mxu0 %v2179
    %v2181 = vand.u32 %v1472, 4294901760
    %v2182 = vsub.f32 %v1472, %v2181
    %2183 = vmatpush1.msra.mxu0 %v2182
    %v2184 = vand.u32 %v1475, 4294901760
    %v2185 = vsub.f32 %v1475, %v2184
    %2186 = vmatprep.subr.mxu0 %v2185
    %v2187 = vand.u32 %v1474, 4294901760
    %v2188 = vsub.f32 %v1474, %v2187
    %2189 = vmatpush1.msra.mxu0 %v2188
    %v2190 = vand.u32 %v1477, 4294901760
    %v2191 = vsub.f32 %v1477, %v2190
    %2192 = vmatprep.subr.mxu0 %v2191
    %v2193 = vand.u32 %v1476, 4294901760
    %v2194 = vsub.f32 %v1476, %v2193
    %2195 = vmatpush1.msra.mxu0 %v2194
    %v2196 = vand.u32 %v1479, 4294901760
    %v2197 = vsub.f32 %v1479, %v2196
    %2198 = vmatprep.subr.mxu0 %v2197
    %v2199 = vand.u32 %v1478, 4294901760
    %v2200 = vsub.f32 %v1478, %v2199
    %2201 = vmatpush1.msra.mxu0 %v2200
    %v2202 = vand.u32 %v1481, 4294901760
    %v2203 = vsub.f32 %v1481, %v2202
    %2204 = vmatprep.subr.mxu0 %v2203
    %v2205 = vand.u32 %v1480, 4294901760
    %v2206 = vsub.f32 %v1480, %v2205
    %2207 = vmatpush1.msra.mxu0 %v2206
    %v2208 = vand.u32 %v1483, 4294901760
    %v2209 = vsub.f32 %v1483, %v2208
    %2210 = vmatprep.subr.mxu0 %v2209
    %v2211 = vand.u32 %v1482, 4294901760
    %v2212 = vsub.f32 %v1482, %v2211
    %2213 = vmatpush1.msra.mxu0 %v2212
    %v2214 = vand.u32 %v1485, 4294901760
    %v2215 = vsub.f32 %v1485, %v2214
    %2216 = vmatprep.subr.mxu0 %v2215
    %v2217 = vand.u32 %v1484, 4294901760
    %v2218 = vsub.f32 %v1484, %v2217
    %2219 = vmatpush1.msra.mxu0 %v2218
    %v2220 = vand.u32 %v1487, 4294901760
    %v2221 = vsub.f32 %v1487, %v2220
    %2222 = vmatprep.subr.mxu0 %v2221
    %v2223 = vand.u32 %v1486, 4294901760
    %v2224 = vsub.f32 %v1486, %v2223
    %2225 = vmatpush1.msra.mxu0 %v2224
    %v2226 = vand.u32 %v1489, 4294901760
    %v2227 = vsub.f32 %v1489, %v2226
    %2228 = vmatprep.subr.mxu0 %v2227
    %v2229 = vand.u32 %v1488, 4294901760
    %v2230 = vsub.f32 %v1488, %v2229
    %2231 = vmatpush1.msra.mxu0 %v2230
    %v2232 = vand.u32 %v1425, 4294901760
    %v2233 = vsub.f32 %v1425, %v2232
    %2234 = vmatprep.mubr.f32.mxu0 %v2233
    %v2235 = vand.u32 %v1424, 4294901760
    %v2236 = vsub.f32 %v1424, %v2235
    %2237 = vmatmul.mubr.f32.gmra.mrb[0].mxu0 %v2236
    %v2238 = vpop.f32.mrb[0].mxu0
    %v2239 = vadd.f32 %v2036, %v2238
    %v2240 = vpop.f32.mrb[0].mxu0
    %v2241 = vadd.f32 %v2038, %v2240
    %2242 = vdwg.mxu0
    %v2243 = vand.u32 %v1427, 4294901760
    %2244 = vmatprep.subr.mxu0 %v2243
    %v2245 = vand.u32 %v1426, 4294901760
    %2246 = vmatpush1.msra.mxu0 %v2245
    %v2247 = vand.u32 %v1429, 4294901760
    %2248 = vmatprep.subr.mxu0 %v2247
    %v2249 = vand.u32 %v1428, 4294901760
    %2250 = vmatpush1.msra.mxu0 %v2249
    %v2251 = vand.u32 %v1431, 4294901760
    %2252 = vmatprep.subr.mxu0 %v2251
    %v2253 = vand.u32 %v1430, 4294901760
    %2254 = vmatpush1.msra.mxu0 %v2253
    %v2255 = vand.u32 %v1433, 4294901760
    %2256 = vmatprep.subr.mxu0 %v2255
    %v2257 = vand.u32 %v1432, 4294901760
    %2258 = vmatpush1.msra.mxu0 %v2257
    %v2259 = vand.u32 %v1435, 4294901760
    %2260 = vmatprep.subr.mxu0 %v2259
    %v2261 = vand.u32 %v1434, 4294901760
    %2262 = vmatpush1.msra.mxu0 %v2261
    %v2263 = vand.u32 %v1437, 4294901760
    %2264 = vmatprep.subr.mxu0 %v2263
    %v2265 = vand.u32 %v1436, 4294901760
    %2266 = vmatpush1.msra.mxu0 %v2265
    %v2267 = vand.u32 %v1439, 4294901760
    %2268 = vmatprep.subr.mxu0 %v2267
    %v2269 = vand.u32 %v1438, 4294901760
    %2270 = vmatpush1.msra.mxu0 %v2269
    %v2271 = vand.u32 %v1441, 4294901760
    %2272 = vmatprep.subr.mxu0 %v2271
    %v2273 = vand.u32 %v1440, 4294901760
    %2274 = vmatpush1.msra.mxu0 %v2273
    %v2275 = vand.u32 %v1443, 4294901760
    %2276 = vmatprep.subr.mxu0 %v2275
    %v2277 = vand.u32 %v1442, 4294901760
    %2278 = vmatpush1.msra.mxu0 %v2277
    %v2279 = vand.u32 %v1445, 4294901760
    %2280 = vmatprep.subr.mxu0 %v2279
    %v2281 = vand.u32 %v1444, 4294901760
    %2282 = vmatpush1.msra.mxu0 %v2281
    %v2283 = vand.u32 %v1447, 4294901760
    %2284 = vmatprep.subr.mxu0 %v2283
    %v2285 = vand.u32 %v1446, 4294901760
    %2286 = vmatpush1.msra.mxu0 %v2285
    %v2287 = vand.u32 %v1449, 4294901760
    %2288 = vmatprep.subr.mxu0 %v2287
    %v2289 = vand.u32 %v1448, 4294901760
    %2290 = vmatpush1.msra.mxu0 %v2289
    %v2291 = vand.u32 %v1451, 4294901760
    %2292 = vmatprep.subr.mxu0 %v2291
    %v2293 = vand.u32 %v1450, 4294901760
    %2294 = vmatpush1.msra.mxu0 %v2293
    %v2295 = vand.u32 %v1453, 4294901760
    %2296 = vmatprep.subr.mxu0 %v2295
    %v2297 = vand.u32 %v1452, 4294901760
    %2298 = vmatpush1.msra.mxu0 %v2297
    %v2299 = vand.u32 %v1455, 4294901760
    %2300 = vmatprep.subr.mxu0 %v2299
    %v2301 = vand.u32 %v1454, 4294901760
    %2302 = vmatpush1.msra.mxu0 %v2301
    %v2303 = vand.u32 %v1457, 4294901760
    %2304 = vmatprep.subr.mxu0 %v2303
    %v2305 = vand.u32 %v1456, 4294901760
    %2306 = vmatpush1.msra.mxu0 %v2305
    %v2307 = vand.u32 %v1459, 4294901760
    %2308 = vmatprep.subr.mxu0 %v2307
    %v2309 = vand.u32 %v1458, 4294901760
    %2310 = vmatpush1.msra.mxu0 %v2309
    %v2311 = vand.u32 %v1461, 4294901760
    %2312 = vmatprep.subr.mxu0 %v2311
    %v2313 = vand.u32 %v1460, 4294901760
    %2314 = vmatpush1.msra.mxu0 %v2313
    %v2315 = vand.u32 %v1463, 4294901760
    %2316 = vmatprep.subr.mxu0 %v2315
    %v2317 = vand.u32 %v1462, 4294901760
    %2318 = vmatpush1.msra.mxu0 %v2317
    %v2319 = vand.u32 %v1465, 4294901760
    %2320 = vmatprep.subr.mxu0 %v2319
    %v2321 = vand.u32 %v1464, 4294901760
    %2322 = vmatpush1.msra.mxu0 %v2321
    %v2323 = vand.u32 %v1467, 4294901760
    %2324 = vmatprep.subr.mxu0 %v2323
    %v2325 = vand.u32 %v1466, 4294901760
    %2326 = vmatpush1.msra.mxu0 %v2325
    %v2327 = vand.u32 %v1469, 4294901760
    %2328 = vmatprep.subr.mxu0 %v2327
    %v2329 = vand.u32 %v1468, 4294901760
    %2330 = vmatpush1.msra.mxu0 %v2329
    %v2331 = vand.u32 %v1471, 4294901760
    %2332 = vmatprep.subr.mxu0 %v2331
    %v2333 = vand.u32 %v1470, 4294901760
    %2334 = vmatpush1.msra.mxu0 %v2333
    %v2335 = vand.u32 %v1473, 4294901760
    %2336 = vmatprep.subr.mxu0 %v2335
    %v2337 = vand.u32 %v1472, 4294901760
    %2338 = vmatpush1.msra.mxu0 %v2337
    %v2339 = vand.u32 %v1475, 4294901760
    %2340 = vmatprep.subr.mxu0 %v2339
    %v2341 = vand.u32 %v1474, 4294901760
    %2342 = vmatpush1.msra.mxu0 %v2341
    %v2343 = vand.u32 %v1477, 4294901760
    %2344 = vmatprep.subr.mxu0 %v2343
    %v2345 = vand.u32 %v1476, 4294901760
    %2346 = vmatpush1.msra.mxu0 %v2345
    %v2347 = vand.u32 %v1479, 4294901760
    %2348 = vmatprep.subr.mxu0 %v2347
    %v2349 = vand.u32 %v1478, 4294901760
    %2350 = vmatpush1.msra.mxu0 %v2349
    %v2351 = vand.u32 %v1481, 4294901760
    %2352 = vmatprep.subr.mxu0 %v2351
    %v2353 = vand.u32 %v1480, 4294901760
    %2354 = vmatpush1.msra.mxu0 %v2353
    %v2355 = vand.u32 %v1483, 4294901760
    %2356 = vmatprep.subr.mxu0 %v2355
    %v2357 = vand.u32 %v1482, 4294901760
    %2358 = vmatpush1.msra.mxu0 %v2357
    %v2359 = vand.u32 %v1485, 4294901760
    %2360 = vmatprep.subr.mxu0 %v2359
    %v2361 = vand.u32 %v1484, 4294901760
    %2362 = vmatpush1.msra.mxu0 %v2361
    %v2363 = vand.u32 %v1487, 4294901760
    %2364 = vmatprep.subr.mxu0 %v2363
    %v2365 = vand.u32 %v1486, 4294901760
    %2366 = vmatpush1.msra.mxu0 %v2365
    %v2367 = vand.u32 %v1489, 4294901760
    %2368 = vmatprep.subr.mxu0 %v2367
    %v2369 = vand.u32 %v1488, 4294901760
    %2370 = vmatpush1.msra.mxu0 %v2369
    %v2371 = vand.u32 %v1425, 4294901760
    %v2372 = vsub.f32 %v1425, %v2371
    %v2373 = vand.u32 %v2372, 4294901760
    %2374 = vmatprep.mubr.f32.mxu0 %v2373
    %v2375 = vand.u32 %v1424, 4294901760
    %v2376 = vsub.f32 %v1424, %v2375
    %v2377 = vand.u32 %v2376, 4294901760
    %2378 = vmatmul.mubr.f32.gmra.mrb[0].mxu0 %v2377
    %v2379 = vpop.f32.mrb[0].mxu0
    %v2380 = vadd.f32 %v2239, %v2379
    %v2381 = vpop.f32.mrb[0].mxu0
    %v2382 = vadd.f32 %v2241, %v2381
    %2383 = vdwg.mxu0
    %v2384 = vand.u32 %v1427, 4294901760
    %v2385 = vsub.f32 %v1427, %v2384
    %v2386 = vand.u32 %v2385, 4294901760
    %2387 = vmatprep.subr.mxu0 %v2386
    %v2388 = vand.u32 %v1426, 4294901760
    %v2389 = vsub.f32 %v1426, %v2388
    %v2390 = vand.u32 %v2389, 4294901760
    %2391 = vmatpush1.msra.mxu0 %v2390
    %v2392 = vand.u32 %v1429, 4294901760
    %v2393 = vsub.f32 %v1429, %v2392
    %v2394 = vand.u32 %v2393, 4294901760
    %2395 = vmatprep.subr.mxu0 %v2394
    %v2396 = vand.u32 %v1428, 4294901760
    %v2397 = vsub.f32 %v1428, %v2396
    %v2398 = vand.u32 %v2397, 4294901760
    %2399 = vmatpush1.msra.mxu0 %v2398
    %v2400 = vand.u32 %v1431, 4294901760
    %v2401 = vsub.f32 %v1431, %v2400
    %v2402 = vand.u32 %v2401, 4294901760
    %2403 = vmatprep.subr.mxu0 %v2402
    %v2404 = vand.u32 %v1430, 4294901760
    %v2405 = vsub.f32 %v1430, %v2404
    %v2406 = vand.u32 %v2405, 4294901760
    %2407 = vmatpush1.msra.mxu0 %v2406
    %v2408 = vand.u32 %v1433, 4294901760
    %v2409 = vsub.f32 %v1433, %v2408
    %v2410 = vand.u32 %v2409, 4294901760
    %2411 = vmatprep.subr.mxu0 %v2410
    %v2412 = vand.u32 %v1432, 4294901760
    %v2413 = vsub.f32 %v1432, %v2412
    %v2414 = vand.u32 %v2413, 4294901760
    %2415 = vmatpush1.msra.mxu0 %v2414
    %v2416 = vand.u32 %v1435, 4294901760
    %v2417 = vsub.f32 %v1435, %v2416
    %v2418 = vand.u32 %v2417, 4294901760
    %2419 = vmatprep.subr.mxu0 %v2418
    %v2420 = vand.u32 %v1434, 4294901760
    %v2421 = vsub.f32 %v1434, %v2420
    %v2422 = vand.u32 %v2421, 4294901760
    %2423 = vmatpush1.msra.mxu0 %v2422
    %v2424 = vand.u32 %v1437, 4294901760
    %v2425 = vsub.f32 %v1437, %v2424
    %v2426 = vand.u32 %v2425, 4294901760
    %2427 = vmatprep.subr.mxu0 %v2426
    %v2428 = vand.u32 %v1436, 4294901760
    %v2429 = vsub.f32 %v1436, %v2428
    %v2430 = vand.u32 %v2429, 4294901760
    %2431 = vmatpush1.msra.mxu0 %v2430
    %v2432 = vand.u32 %v1439, 4294901760
    %v2433 = vsub.f32 %v1439, %v2432
    %v2434 = vand.u32 %v2433, 4294901760
    %2435 = vmatprep.subr.mxu0 %v2434
    %v2436 = vand.u32 %v1438, 4294901760
    %v2437 = vsub.f32 %v1438, %v2436
    %v2438 = vand.u32 %v2437, 4294901760
    %2439 = vmatpush1.msra.mxu0 %v2438
    %v2440 = vand.u32 %v1441, 4294901760
    %v2441 = vsub.f32 %v1441, %v2440
    %v2442 = vand.u32 %v2441, 4294901760
    %2443 = vmatprep.subr.mxu0 %v2442
    %v2444 = vand.u32 %v1440, 4294901760
    %v2445 = vsub.f32 %v1440, %v2444
    %v2446 = vand.u32 %v2445, 4294901760
    %2447 = vmatpush1.msra.mxu0 %v2446
    %v2448 = vand.u32 %v1443, 4294901760
    %v2449 = vsub.f32 %v1443, %v2448
    %v2450 = vand.u32 %v2449, 4294901760
    %2451 = vmatprep.subr.mxu0 %v2450
    %v2452 = vand.u32 %v1442, 4294901760
    %v2453 = vsub.f32 %v1442, %v2452
    %v2454 = vand.u32 %v2453, 4294901760
    %2455 = vmatpush1.msra.mxu0 %v2454
    %v2456 = vand.u32 %v1445, 4294901760
    %v2457 = vsub.f32 %v1445, %v2456
    %v2458 = vand.u32 %v2457, 4294901760
    %2459 = vmatprep.subr.mxu0 %v2458
    %v2460 = vand.u32 %v1444, 4294901760
    %v2461 = vsub.f32 %v1444, %v2460
    %v2462 = vand.u32 %v2461, 4294901760
    %2463 = vmatpush1.msra.mxu0 %v2462
    %v2464 = vand.u32 %v1447, 4294901760
    %v2465 = vsub.f32 %v1447, %v2464
    %v2466 = vand.u32 %v2465, 4294901760
    %2467 = vmatprep.subr.mxu0 %v2466
    %v2468 = vand.u32 %v1446, 4294901760
    %v2469 = vsub.f32 %v1446, %v2468
    %v2470 = vand.u32 %v2469, 4294901760
    %2471 = vmatpush1.msra.mxu0 %v2470
    %v2472 = vand.u32 %v1449, 4294901760
    %v2473 = vsub.f32 %v1449, %v2472
    %v2474 = vand.u32 %v2473, 4294901760
    %2475 = vmatprep.subr.mxu0 %v2474
    %v2476 = vand.u32 %v1448, 4294901760
    %v2477 = vsub.f32 %v1448, %v2476
    %v2478 = vand.u32 %v2477, 4294901760
    %2479 = vmatpush1.msra.mxu0 %v2478
    %v2480 = vand.u32 %v1451, 4294901760
    %v2481 = vsub.f32 %v1451, %v2480
    %v2482 = vand.u32 %v2481, 4294901760
    %2483 = vmatprep.subr.mxu0 %v2482
    %v2484 = vand.u32 %v1450, 4294901760
    %v2485 = vsub.f32 %v1450, %v2484
    %v2486 = vand.u32 %v2485, 4294901760
    %2487 = vmatpush1.msra.mxu0 %v2486
    %v2488 = vand.u32 %v1453, 4294901760
    %v2489 = vsub.f32 %v1453, %v2488
    %v2490 = vand.u32 %v2489, 4294901760
    %2491 = vmatprep.subr.mxu0 %v2490
    %v2492 = vand.u32 %v1452, 4294901760
    %v2493 = vsub.f32 %v1452, %v2492
    %v2494 = vand.u32 %v2493, 4294901760
    %2495 = vmatpush1.msra.mxu0 %v2494
    %v2496 = vand.u32 %v1455, 4294901760
    %v2497 = vsub.f32 %v1455, %v2496
    %v2498 = vand.u32 %v2497, 4294901760
    %2499 = vmatprep.subr.mxu0 %v2498
    %v2500 = vand.u32 %v1454, 4294901760
    %v2501 = vsub.f32 %v1454, %v2500
    %v2502 = vand.u32 %v2501, 4294901760
    %2503 = vmatpush1.msra.mxu0 %v2502
    %v2504 = vand.u32 %v1457, 4294901760
    %v2505 = vsub.f32 %v1457, %v2504
    %v2506 = vand.u32 %v2505, 4294901760
    %2507 = vmatprep.subr.mxu0 %v2506
    %v2508 = vand.u32 %v1456, 4294901760
    %v2509 = vsub.f32 %v1456, %v2508
    %v2510 = vand.u32 %v2509, 4294901760
    %2511 = vmatpush1.msra.mxu0 %v2510
    %v2512 = vand.u32 %v1459, 4294901760
    %v2513 = vsub.f32 %v1459, %v2512
    %v2514 = vand.u32 %v2513, 4294901760
    %2515 = vmatprep.subr.mxu0 %v2514
    %v2516 = vand.u32 %v1458, 4294901760
    %v2517 = vsub.f32 %v1458, %v2516
    %v2518 = vand.u32 %v2517, 4294901760
    %2519 = vmatpush1.msra.mxu0 %v2518
    %v2520 = vand.u32 %v1461, 4294901760
    %v2521 = vsub.f32 %v1461, %v2520
    %v2522 = vand.u32 %v2521, 4294901760
    %2523 = vmatprep.subr.mxu0 %v2522
    %v2524 = vand.u32 %v1460, 4294901760
    %v2525 = vsub.f32 %v1460, %v2524
    %v2526 = vand.u32 %v2525, 4294901760
    %2527 = vmatpush1.msra.mxu0 %v2526
    %v2528 = vand.u32 %v1463, 4294901760
    %v2529 = vsub.f32 %v1463, %v2528
    %v2530 = vand.u32 %v2529, 4294901760
    %2531 = vmatprep.subr.mxu0 %v2530
    %v2532 = vand.u32 %v1462, 4294901760
    %v2533 = vsub.f32 %v1462, %v2532
    %v2534 = vand.u32 %v2533, 4294901760
    %2535 = vmatpush1.msra.mxu0 %v2534
    %v2536 = vand.u32 %v1465, 4294901760
    %v2537 = vsub.f32 %v1465, %v2536
    %v2538 = vand.u32 %v2537, 4294901760
    %2539 = vmatprep.subr.mxu0 %v2538
    %v2540 = vand.u32 %v1464, 4294901760
    %v2541 = vsub.f32 %v1464, %v2540
    %v2542 = vand.u32 %v2541, 4294901760
    %2543 = vmatpush1.msra.mxu0 %v2542
    %v2544 = vand.u32 %v1467, 4294901760
    %v2545 = vsub.f32 %v1467, %v2544
    %v2546 = vand.u32 %v2545, 4294901760
    %2547 = vmatprep.subr.mxu0 %v2546
    %v2548 = vand.u32 %v1466, 4294901760
    %v2549 = vsub.f32 %v1466, %v2548
    %v2550 = vand.u32 %v2549, 4294901760
    %2551 = vmatpush1.msra.mxu0 %v2550
    %v2552 = vand.u32 %v1469, 4294901760
    %v2553 = vsub.f32 %v1469, %v2552
    %v2554 = vand.u32 %v2553, 4294901760
    %2555 = vmatprep.subr.mxu0 %v2554
    %v2556 = vand.u32 %v1468, 4294901760
    %v2557 = vsub.f32 %v1468, %v2556
    %v2558 = vand.u32 %v2557, 4294901760
    %2559 = vmatpush1.msra.mxu0 %v2558
    %v2560 = vand.u32 %v1471, 4294901760
    %v2561 = vsub.f32 %v1471, %v2560
    %v2562 = vand.u32 %v2561, 4294901760
    %2563 = vmatprep.subr.mxu0 %v2562
    %v2564 = vand.u32 %v1470, 4294901760
    %v2565 = vsub.f32 %v1470, %v2564
    %v2566 = vand.u32 %v2565, 4294901760
    %2567 = vmatpush1.msra.mxu0 %v2566
    %v2568 = vand.u32 %v1473, 4294901760
    %v2569 = vsub.f32 %v1473, %v2568
    %v2570 = vand.u32 %v2569, 4294901760
    %2571 = vmatprep.subr.mxu0 %v2570
    %v2572 = vand.u32 %v1472, 4294901760
    %v2573 = vsub.f32 %v1472, %v2572
    %v2574 = vand.u32 %v2573, 4294901760
    %2575 = vmatpush1.msra.mxu0 %v2574
    %v2576 = vand.u32 %v1475, 4294901760
    %v2577 = vsub.f32 %v1475, %v2576
    %v2578 = vand.u32 %v2577, 4294901760
    %2579 = vmatprep.subr.mxu0 %v2578
    %v2580 = vand.u32 %v1474, 4294901760
    %v2581 = vsub.f32 %v1474, %v2580
    %v2582 = vand.u32 %v2581, 4294901760
    %2583 = vmatpush1.msra.mxu0 %v2582
    %v2584 = vand.u32 %v1477, 4294901760
    %v2585 = vsub.f32 %v1477, %v2584
    %v2586 = vand.u32 %v2585, 4294901760
    %2587 = vmatprep.subr.mxu0 %v2586
    %v2588 = vand.u32 %v1476, 4294901760
    %v2589 = vsub.f32 %v1476, %v2588
    %v2590 = vand.u32 %v2589, 4294901760
    %2591 = vmatpush1.msra.mxu0 %v2590
    %v2592 = vand.u32 %v1479, 4294901760
    %v2593 = vsub.f32 %v1479, %v2592
    %v2594 = vand.u32 %v2593, 4294901760
    %2595 = vmatprep.subr.mxu0 %v2594
    %v2596 = vand.u32 %v1478, 4294901760
    %v2597 = vsub.f32 %v1478, %v2596
    %v2598 = vand.u32 %v2597, 4294901760
    %2599 = vmatpush1.msra.mxu0 %v2598
    %v2600 = vand.u32 %v1481, 4294901760
    %v2601 = vsub.f32 %v1481, %v2600
    %v2602 = vand.u32 %v2601, 4294901760
    %2603 = vmatprep.subr.mxu0 %v2602
    %v2604 = vand.u32 %v1480, 4294901760
    %v2605 = vsub.f32 %v1480, %v2604
    %v2606 = vand.u32 %v2605, 4294901760
    %2607 = vmatpush1.msra.mxu0 %v2606
    %v2608 = vand.u32 %v1483, 4294901760
    %v2609 = vsub.f32 %v1483, %v2608
    %v2610 = vand.u32 %v2609, 4294901760
    %2611 = vmatprep.subr.mxu0 %v2610
    %v2612 = vand.u32 %v1482, 4294901760
    %v2613 = vsub.f32 %v1482, %v2612
    %v2614 = vand.u32 %v2613, 4294901760
    %2615 = vmatpush1.msra.mxu0 %v2614
    %v2616 = vand.u32 %v1485, 4294901760
    %v2617 = vsub.f32 %v1485, %v2616
    %v2618 = vand.u32 %v2617, 4294901760
    %2619 = vmatprep.subr.mxu0 %v2618
    %v2620 = vand.u32 %v1484, 4294901760
    %v2621 = vsub.f32 %v1484, %v2620
    %v2622 = vand.u32 %v2621, 4294901760
    %2623 = vmatpush1.msra.mxu0 %v2622
    %v2624 = vand.u32 %v1487, 4294901760
    %v2625 = vsub.f32 %v1487, %v2624
    %v2626 = vand.u32 %v2625, 4294901760
    %2627 = vmatprep.subr.mxu0 %v2626
    %v2628 = vand.u32 %v1486, 4294901760
    %v2629 = vsub.f32 %v1486, %v2628
    %v2630 = vand.u32 %v2629, 4294901760
    %2631 = vmatpush1.msra.mxu0 %v2630
    %v2632 = vand.u32 %v1489, 4294901760
    %v2633 = vsub.f32 %v1489, %v2632
    %v2634 = vand.u32 %v2633, 4294901760
    %2635 = vmatprep.subr.mxu0 %v2634
    %v2636 = vand.u32 %v1488, 4294901760
    %v2637 = vsub.f32 %v1488, %v2636
    %v2638 = vand.u32 %v2637, 4294901760
    %2639 = vmatpush1.msra.mxu0 %v2638
    %v2640 = vand.u32 %v1425, 4294901760
    %2641 = vmatprep.mubr.f32.mxu0 %v2640
    %v2642 = vand.u32 %v1424, 4294901760
    %2643 = vmatmul.mubr.f32.gmra.mrb[0].mxu0 %v2642
    %v2644 = vpop.f32.mrb[0].mxu0
    %v2645 = vadd.f32 %v2380, %v2644
    %v2646 = vpop.f32.mrb[0].mxu0
    %v2647 = vadd.f32 %v2382, %v2646
    %2648 = vdwg.mxu0
    %v2649 = vand.u32 %v1427, 4294901760
    %2650 = vmatprep.subr.mxu0 %v2649
    %v2651 = vand.u32 %v1426, 4294901760
    %2652 = vmatpush1.msra.mxu0 %v2651
    %v2653 = vand.u32 %v1429, 4294901760
    %2654 = vmatprep.subr.mxu0 %v2653
    %v2655 = vand.u32 %v1428, 4294901760
    %2656 = vmatpush1.msra.mxu0 %v2655
    %v2657 = vand.u32 %v1431, 4294901760
    %2658 = vmatprep.subr.mxu0 %v2657
    %v2659 = vand.u32 %v1430, 4294901760
    %2660 = vmatpush1.msra.mxu0 %v2659
    %v2661 = vand.u32 %v1433, 4294901760
    %2662 = vmatprep.subr.mxu0 %v2661
    %v2663 = vand.u32 %v1432, 4294901760
    %2664 = vmatpush1.msra.mxu0 %v2663
    %v2665 = vand.u32 %v1435, 4294901760
    %2666 = vmatprep.subr.mxu0 %v2665
    %v2667 = vand.u32 %v1434, 4294901760
    %2668 = vmatpush1.msra.mxu0 %v2667
    %v2669 = vand.u32 %v1437, 4294901760
    %2670 = vmatprep.subr.mxu0 %v2669
    %v2671 = vand.u32 %v1436, 4294901760
    %2672 = vmatpush1.msra.mxu0 %v2671
    %v2673 = vand.u32 %v1439, 4294901760
    %2674 = vmatprep.subr.mxu0 %v2673
    %v2675 = vand.u32 %v1438, 4294901760
    %2676 = vmatpush1.msra.mxu0 %v2675
    %v2677 = vand.u32 %v1441, 4294901760
    %2678 = vmatprep.subr.mxu0 %v2677
    %v2679 = vand.u32 %v1440, 4294901760
    %2680 = vmatpush1.msra.mxu0 %v2679
    %v2681 = vand.u32 %v1443, 4294901760
    %2682 = vmatprep.subr.mxu0 %v2681
    %v2683 = vand.u32 %v1442, 4294901760
    %2684 = vmatpush1.msra.mxu0 %v2683
    %v2685 = vand.u32 %v1445, 4294901760
    %2686 = vmatprep.subr.mxu0 %v2685
    %v2687 = vand.u32 %v1444, 4294901760
    %2688 = vmatpush1.msra.mxu0 %v2687
    %v2689 = vand.u32 %v1447, 4294901760
    %2690 = vmatprep.subr.mxu0 %v2689
    %v2691 = vand.u32 %v1446, 4294901760
    %2692 = vmatpush1.msra.mxu0 %v2691
    %v2693 = vand.u32 %v1449, 4294901760
    %2694 = vmatprep.subr.mxu0 %v2693
    %v2695 = vand.u32 %v1448, 4294901760
    %2696 = vmatpush1.msra.mxu0 %v2695
    %v2697 = vand.u32 %v1451, 4294901760
    %2698 = vmatprep.subr.mxu0 %v2697
    %v2699 = vand.u32 %v1450, 4294901760
    %2700 = vmatpush1.msra.mxu0 %v2699
    %v2701 = vand.u32 %v1453, 4294901760
    %2702 = vmatprep.subr.mxu0 %v2701
    %v2703 = vand.u32 %v1452, 4294901760
    %2704 = vmatpush1.msra.mxu0 %v2703
    %v2705 = vand.u32 %v1455, 4294901760
    %2706 = vmatprep.subr.mxu0 %v2705
    %v2707 = vand.u32 %v1454, 4294901760
    %2708 = vmatpush1.msra.mxu0 %v2707
    %v2709 = vand.u32 %v1457, 4294901760
    %2710 = vmatprep.subr.mxu0 %v2709
    %v2711 = vand.u32 %v1456, 4294901760
    %2712 = vmatpush1.msra.mxu0 %v2711
    %v2713 = vand.u32 %v1459, 4294901760
    %2714 = vmatprep.subr.mxu0 %v2713
    %v2715 = vand.u32 %v1458, 4294901760
    %2716 = vmatpush1.msra.mxu0 %v2715
    %v2717 = vand.u32 %v1461, 4294901760
    %2718 = vmatprep.subr.mxu0 %v2717
    %v2719 = vand.u32 %v1460, 4294901760
    %2720 = vmatpush1.msra.mxu0 %v2719
    %v2721 = vand.u32 %v1463, 4294901760
    %2722 = vmatprep.subr.mxu0 %v2721
    %v2723 = vand.u32 %v1462, 4294901760
    %2724 = vmatpush1.msra.mxu0 %v2723
    %v2725 = vand.u32 %v1465, 4294901760
    %2726 = vmatprep.subr.mxu0 %v2725
    %v2727 = vand.u32 %v1464, 4294901760
    %2728 = vmatpush1.msra.mxu0 %v2727
    %v2729 = vand.u32 %v1467, 4294901760
    %2730 = vmatprep.subr.mxu0 %v2729
    %v2731 = vand.u32 %v1466, 4294901760
    %2732 = vmatpush1.msra.mxu0 %v2731
    %v2733 = vand.u32 %v1469, 4294901760
    %2734 = vmatprep.subr.mxu0 %v2733
    %v2735 = vand.u32 %v1468, 4294901760
    %2736 = vmatpush1.msra.mxu0 %v2735
    %v2737 = vand.u32 %v1471, 4294901760
    %2738 = vmatprep.subr.mxu0 %v2737
    %v2739 = vand.u32 %v1470, 4294901760
    %2740 = vmatpush1.msra.mxu0 %v2739
    %v2741 = vand.u32 %v1473, 4294901760
    %2742 = vmatprep.subr.mxu0 %v2741
    %v2743 = vand.u32 %v1472, 4294901760
    %2744 = vmatpush1.msra.mxu0 %v2743
    %v2745 = vand.u32 %v1475, 4294901760
    %2746 = vmatprep.subr.mxu0 %v2745
    %v2747 = vand.u32 %v1474, 4294901760
    %2748 = vmatpush1.msra.mxu0 %v2747
    %v2749 = vand.u32 %v1477, 4294901760
    %2750 = vmatprep.subr.mxu0 %v2749
    %v2751 = vand.u32 %v1476, 4294901760
    %2752 = vmatpush1.msra.mxu0 %v2751
    %v2753 = vand.u32 %v1479, 4294901760
    %2754 = vmatprep.subr.mxu0 %v2753
    %v2755 = vand.u32 %v1478, 4294901760
    %2756 = vmatpush1.msra.mxu0 %v2755
    %v2757 = vand.u32 %v1481, 4294901760
    %2758 = vmatprep.subr.mxu0 %v2757
    %v2759 = vand.u32 %v1480, 4294901760
    %2760 = vmatpush1.msra.mxu0 %v2759
    %v2761 = vand.u32 %v1483, 4294901760
    %2762 = vmatprep.subr.mxu0 %v2761
    %v2763 = vand.u32 %v1482, 4294901760
    %2764 = vmatpush1.msra.mxu0 %v2763
    %v2765 = vand.u32 %v1485, 4294901760
    %2766 = vmatprep.subr.mxu0 %v2765
    %v2767 = vand.u32 %v1484, 4294901760
    %2768 = vmatpush1.msra.mxu0 %v2767
    %v2769 = vand.u32 %v1487, 4294901760
    %2770 = vmatprep.subr.mxu0 %v2769
    %v2771 = vand.u32 %v1486, 4294901760
    %2772 = vmatpush1.msra.mxu0 %v2771
    %v2773 = vand.u32 %v1489, 4294901760
    %2774 = vmatprep.subr.mxu0 %v2773
    %v2775 = vand.u32 %v1488, 4294901760
    %2776 = vmatpush1.msra.mxu0 %v2775
    %v2777 = vand.u32 %v1425, 4294901760
    %2778 = vmatprep.mubr.f32.mxu0 %v2777
    %v2779 = vand.u32 %v1424, 4294901760
    %2780 = vmatmul.mubr.f32.gmra.mrb[0].mxu0 %v2779
    %v2781 = vpop.f32.mrb[0].mxu0
    %v2782 = vadd.f32 %v2645, %v2781
    %v2783 = vpop.f32.mrb[0].mxu0
    %v2784 = vadd.f32 %v2647, %v2783
    %2785 = vdwg.mxu0
    %2786 = vst [vmem:[#allocation8] sm:$0xff] %v2782
    %2787 = vst [vmem:[#allocation8 + $0x8] sm:$0xff] %v2784
    // Predicated region
    $region42: #{tpu_custom_call.1} parent=1 // pred_check
      _
    $region43: #{tpu_custom_call.1} parent=1 // pred_check_branch
      %2789 = sbr.rel (0) target = $region45
    $region44: #{tpu_custom_call.1} parent=1 // pred_region
      %s2791 = ssub.s32 256, 256
      %2792 = vsyncadd [#allocation4], %s2791
      %s2794 = sshll.u32 [#allocation8], 4
      %s2795 = int_to_ptr.vmem [resolvable:$true] %s2794
      %2797 = dma.vmem_to_hbm [thread:$0]  %s2795, 256, %s7, [#allocation4]
    $region45: #{tpu_custom_call.1} parent=1 // pred_fallthru
      _
    // Predicated region
    $region46: #{tpu_custom_call.1} parent=1 // pred_check
      _
    $region47: #{tpu_custom_call.1} parent=1 // pred_check_branch
      %2799 = sbr.rel (0) target = $region49
    $region48: #{tpu_custom_call.1} parent=1 // pred_region
      %2800 = dma.done [#allocation4], 256
    $region49: #{tpu_custom_call.1} parent=1 // pred_fallthru
      _
    %2801 = vsyncpa [#allocation3], 1
    %2802 = vsyncpa [#allocation6], 1
    %2803 = vsyncpa [#allocation4], 1

</llo_original>
